<compile_context>
chip_gen: v6e
topology: v6e:2x2x1
jax: 0.10.0
libtpu: 0.0.40
codegen_flags: <defaults>
</compile_context>

<pallas_src>
import functools

import jax
import jax.numpy as jnp
from jax.experimental import pallas as pl
from jax.experimental.pallas import tpu as pltpu


def _round_up(x, m):
    return (x + m - 1) // m * m


def _pad_to(a, shape):
    return jnp.pad(a, [(0, s - d) for d, s in zip(a.shape, shape)])


# ----------------------------- kernel ---------------------------------------

def mpnn_kernel(x_ref, src_col_ref, dst_col_ref, dst_row_ref, ea_ref,
                win_ref, bin_ref,
                wm1_hi_ref, wm1_hj_ref, wm1_ea_ref, bm1_ref, wm2_ref, bm2_ref,
                wu1_h_ref, wu1_a_ref, bu1_ref, wu2_ref, bu2_ref,
                out_ref,
                h_ref, aggr_ref, hwi_ref, hwj_ref,
                *, n_pad):
    layer = pl.program_id(0)
    et = pl.program_id(1)
    num_layers = pl.num_programs(0)
    num_et = pl.num_programs(1)
    f32, bf16 = jnp.float32, jnp.bfloat16

    # ---- one-time init: h = x @ W_in + b_in (first grid step only) ----------
    @pl.when(jnp.logical_and(layer == 0, et == 0))
    def _():
        h_ref[...] = (jnp.dot(x_ref[...].astype(bf16), win_ref[...],
                              preferred_element_type=f32) + bin_ref[...])

    # ---- once per layer: zero accumulator, hoist msg-layer-1 node projections
    @pl.when(et == 0)
    def _():
        aggr_ref[...] = jnp.zeros_like(aggr_ref)
        h_b = h_ref[...].astype(bf16)
        hwi_ref[...] = jnp.dot(h_b, wm1_hi_ref[...],
                               preferred_element_type=f32).astype(bf16)
        hwj_ref[...] = jnp.dot(h_b, wm1_hj_ref[...],
                               preferred_element_type=f32).astype(bf16)

    # ---- message phase for this edge tile ------------------------------------
    te = ea_ref.shape[0]
    # gather one-hots (TE, N): row t selects node src[t] / dst[t]
    iota_en = jax.lax.broadcasted_iota(jnp.int32, (te, n_pad), 1)
    s_src = jnp.where(iota_en == src_col_ref[...], 1.0, 0.0).astype(bf16)
    s_dst = jnp.where(iota_en == dst_col_ref[...], 1.0, 0.0).astype(bf16)
    # scatter one-hot (N, TE): column t deposits message t onto node dst[t]
    iota_ne = jax.lax.broadcasted_iota(jnp.int32, (n_pad, te), 0)
    s_dst_t = jnp.where(iota_ne == dst_row_ref[...], 1.0, 0.0).astype(bf16)

    # mlp_msg layer 1 over cat([h_i, h_j, edge_attr]):
    #   gathers of the pre-projected node features + edge-attr projection.
    m = (jnp.dot(s_dst, hwi_ref[...], preferred_element_type=f32)
         + jnp.dot(s_src, hwj_ref[...], preferred_element_type=f32)
         + jnp.dot(ea_ref[...].astype(bf16), wm1_ea_ref[...],
                   preferred_element_type=f32)
         + bm1_ref[...])
    m = jnp.maximum(m, 0.0)
    # mlp_msg layer 2 (Dropout identity in eval mode; BatchNorm folded into W/b)
    m = jnp.maximum(jnp.dot(m.astype(bf16), wm2_ref[...],
                            preferred_element_type=f32) + bm2_ref[...], 0.0)

    # scatter-add messages onto destination nodes (standard matmul, no transpose)
    aggr_ref[...] += jnp.dot(s_dst_t, m.astype(bf16), preferred_element_type=f32)

    # ---- update phase: after the last edge tile of this layer ----------------
    @pl.when(et == num_et - 1)
    def _():
        h = h_ref[...]
        u = (jnp.dot(h.astype(bf16), wu1_h_ref[...], preferred_element_type=f32)
             + jnp.dot(aggr_ref[...].astype(bf16), wu1_a_ref[...],
                       preferred_element_type=f32)
             + bu1_ref[...])
        u = jnp.maximum(u, 0.0)
        u = jnp.maximum(jnp.dot(u.astype(bf16), wu2_ref[...],
                                preferred_element_type=f32) + bu2_ref[...], 0.0)
        h_ref[...] = h + u        # MPNNModel residual: h = h + conv(h, ...)

    @pl.when(jnp.logical_and(layer == num_layers - 1, et == num_et - 1))
    def _():
        out_ref[...] = h_ref[...]


# ----------------------------- wrapper ---------------------------------------

def mpnn_forward(x, edge_index, edge_attr, params, *, num_layers, emb_dim,
                 edge_tile=512):
    f32, bf16 = jnp.float32, jnp.bfloat16
    n, d_in = x.shape
    e = edge_index.shape[0]
    d_e = edge_attr.shape[1]
    d = emb_dim
    L = num_layers

    d_pad = _round_up(d, 128)      # lane-dense matmul N/K dims and output store
    n_pad = _round_up(n, 8)        # sublane alignment of the node axis
    if e <= edge_tile:
        te = _round_up(e, 8)       # single tile: block == full extent
        e_pad = te
    else:
        te = edge_tile             # multiple of 128 -> lane-dense (1, TE) blocks
        e_pad = _round_up(e, te)
    n_et = e_pad // te

    # ---- pad / lay out inputs -------------------------------------------------
    x_p = _pad_to(x.astype(f32), (n_pad, d_in))
    ea_p = _pad_to(edge_attr.astype(f32), (e_pad, d_e))
    src = edge_index[:, 0].astype(jnp.int32)     # column 0 = source j
    dst = edge_index[:, 1].astype(jnp.int32)     # column 1 = destination i
    pad_idx = jnp.full((e_pad - e,), -1, jnp.int32)   # -1 matches no node
    src_p = jnp.concatenate([src, pad_idx])
    dst_p = jnp.concatenate([dst, pad_idx])
    src_col, dst_col = src_p[:, None], dst_p[:, None]   # (E_pad, 1) for gathers
    dst_row = dst_p[None, :]                            # (1, E_pad) for scatter

    # ---- pre-split, zero-pad, bf16-cast weights (done once, outside kernel) ---
    win_p = _pad_to(params["win"], (d_in, d_pad)).astype(bf16)
    bin_p = _pad_to(params["bin"][None, :], (1, d_pad))
    wm1 = params["wm1"]                                  # (L, 2d+de, d)
    wm1_hi = _pad_to(wm1[:, 0:d, :], (L, d_pad, d_pad)).astype(bf16)
    wm1_hj = _pad_to(wm1[:, d:2 * d, :], (L, d_pad, d_pad)).astype(bf16)
    wm1_ea = _pad_to(wm1[:, 2 * d:, :], (L, d_e, d_pad)).astype(bf16)
    bm1 = _pad_to(params["bm1"][:, None, :], (L, 1, d_pad))
    wm2 = _pad_to(params["wm2"], (L, d_pad, d_pad)).astype(bf16)
    bm2 = _pad_to(params["bm2"][:, None, :], (L, 1, d_pad))
    wu1 = params["wu1"]                                  # (L, 2d, d)
    wu1_h = _pad_to(wu1[:, 0:d, :], (L, d_pad, d_pad)).astype(bf16)
    wu1_a = _pad_to(wu1[:, d:2 * d, :], (L, d_pad, d_pad)).astype(bf16)
    bu1 = _pad_to(params["bu1"][:, None, :], (L, 1, d_pad))
    wu2 = _pad_to(params["wu2"], (L, d_pad, d_pad)).astype(bf16)
    bu2 = _pad_to(params["bu2"][:, None, :], (L, 1, d_pad))

    const2 = lambda l, t: (0, 0)            # resident across the whole grid
    per_layer = lambda l, t: (l, 0, 0)      # re-DMA only when the layer changes
    edge_rows = lambda l, t: (t, 0)         # stream edge tiles (sublane-major)
    edge_cols = lambda l, t: (0, t)         # stream edge tiles (lane-major)

    in_specs = [
        pl.BlockSpec((n_pad, d_in), const2),              # x
        pl.BlockSpec((te, 1), edge_rows),                 # src (column layout)
        pl.BlockSpec((te, 1), edge_rows),                 # dst (column layout)
        pl.BlockSpec((1, te), edge_cols),                 # dst (lane-major)
        pl.BlockSpec((te, d_e), edge_rows),               # edge_attr
        pl.BlockSpec((d_in, d_pad), const2),              # W_in
        pl.BlockSpec((1, d_pad), const2),                 # b_in
        pl.BlockSpec((None, d_pad, d_pad), per_layer),    # wm1[:, :d]   (h_i)
        pl.BlockSpec((None, d_pad, d_pad), per_layer),    # wm1[:, d:2d] (h_j)
        pl.BlockSpec((None, d_e, d_pad), per_layer),      # wm1[:, 2d:]  (e_attr)
        pl.BlockSpec((None, 1, d_pad), per_layer),        # bm1
        pl.BlockSpec((None, d_pad, d_pad), per_layer),    # wm2
        pl.BlockSpec((None, 1, d_pad), per_layer),        # bm2
        pl.BlockSpec((None, d_pad, d_pad), per_layer),    # wu1[:, :d]   (h)
        pl.BlockSpec((None, d_pad, d_pad), per_layer),    # wu1[:, d:2d] (aggr)
        pl.BlockSpec((None, 1, d_pad), per_layer),        # bu1
        pl.BlockSpec((None, d_pad, d_pad), per_layer),    # wu2
        pl.BlockSpec((None, 1, d_pad), per_layer),        # bu2
    ]
    out_spec = pl.BlockSpec((n_pad, d_pad), const2)

    flops = 2 * (n_pad * d_in * d_pad
                 + L * (2 * n_pad * d_pad * d_pad          # hoisted msg projections
                        + 3 * e_pad * n_pad * d_pad        # gather x2 + scatter
                        + e_pad * d_e * d_pad              # edge-attr projection
                        + e_pad * d_pad * d_pad            # msg layer 2
                        + 3 * n_pad * d_pad * d_pad))      # upd layers
    w_bytes = 2 * (win_p.size + wm1_hi.size + wm1_hj.size + wm1_ea.size
                   + wm2.size + wu1_h.size + wu1_a.size + wu2.size)
    b_bytes = 4 * (bin_p.size + bm1.size + bm2.size + bu1.size + bu2.size)
    edge_bytes = L * 4 * (ea_p.size + src_col.size + dst_col.size + dst_row.size)
    bytes_accessed = 4 * (x_p.size + n_pad * d_pad) + w_bytes + b_bytes + edge_bytes

    kernel = functools.partial(mpnn_kernel, n_pad=n_pad)
    out = pl.pallas_call(
        kernel,
        out_shape=jax.ShapeDtypeStruct((n_pad, d_pad), f32),
        grid_spec=pltpu.PrefetchScalarGridSpec(
            num_scalar_prefetch=0,
            grid=(L, n_et),                          # (layer, edge-tile)
            in_specs=in_specs,
            out_specs=out_spec,
            scratch_shapes=[pltpu.VMEM((n_pad, d_pad), f32),    # resident h
                            pltpu.VMEM((n_pad, d_pad), f32),    # aggr accumulator
                            pltpu.VMEM((n_pad, d_pad), bf16),   # h @ W_hi (per layer)
                            pltpu.VMEM((n_pad, d_pad), bf16)],  # h @ W_hj (per layer)
        ),
        compiler_params=pltpu.CompilerParams(
            dimension_semantics=("arbitrary", "arbitrary"),
            # Budget sized with v7x's 64 MiB VMEM in mind; tiles are TE-bounded.
            vmem_limit_bytes=48 * 1024 * 1024),
        cost_estimate=pl.CostEstimate(flops=flops, transcendentals=0,
                                      bytes_accessed=int(bytes_accessed)),
    )(x_p, src_col, dst_col, dst_row, ea_p,
      win_p, bin_p, wm1_hi, wm1_hj, wm1_ea, bm1, wm2, bm2,
      wu1_h, wu1_a, bu1, wu2, bu2)
    return out[:n, :d]


# ----------------------- parameter setup (plain-JAX glue) --------------------

def _linear_init(key, fan_in, fan_out):
    """torch.nn.Linear default init; stored (in, out) so forward is x @ W + b."""
    kw, kb = jax.random.split(key)
    bound = 1.0 / jnp.sqrt(jnp.float32(fan_in))
    w = jax.random.uniform(kw, (fan_in, fan_out), jnp.float32, -bound, bound)
    b = jax.random.uniform(kb, (fan_out,), jnp.float32, -bound, bound)
    return w, b


def _fold_bn(w, b, gamma, beta, mean, var, eps=1e-5):
    """Fold eval-mode BatchNorm1d into the preceding Linear."""
    scale = gamma / jnp.sqrt(var + eps)
    shift = beta - mean * scale
    return w * scale[None, :], b * scale + shift


def init_params(key, num_layers, emb_dim, input_dim, edge_dim):
    d, de = emb_dim, edge_dim
    keys = jax.random.split(key, 1 + 4 * num_layers)
    win, bin_ = _linear_init(keys[0], input_dim, d)

    def bn_default(dim):
        return (jnp.ones((dim,), jnp.float32), jnp.zeros((dim,), jnp.float32),
                jnp.zeros((dim,), jnp.float32), jnp.ones((dim,), jnp.float32))

    wm1s, bm1s, wm2s, bm2s, wu1s, bu1s, wu2s, bu2s = ([] for _ in range(8))
    for l in range(num_layers):
        k0, k1, k2, k3 = keys[1 + 4 * l: 1 + 4 * (l + 1)]
        w, b = _fold_bn(*_linear_init(k0, 2 * d + de, d), *bn_default(d))
        wm1s.append(w); bm1s.append(b)
        w, b = _fold_bn(*_linear_init(k1, d, d), *bn_default(d))
        wm2s.append(w); bm2s.append(b)
        w, b = _fold_bn(*_linear_init(k2, 2 * d, d), *bn_default(d))
        wu1s.append(w); bu1s.append(b)
        w, b = _fold_bn(*_linear_init(k3, d, d), *bn_default(d))
        wu2s.append(w); bu2s.append(b)

    return {
        "win": win, "bin": bin_,
        "wm1": jnp.stack(wm1s), "bm1": jnp.stack(bm1s),
        "wm2": jnp.stack(wm2s), "bm2": jnp.stack(bm2s),
        "wu1": jnp.stack(wu1s), "bu1": jnp.stack(bu1s),
        "wu2": jnp.stack(wu2s), "bu2": jnp.stack(bu2s),
    }


# ----------------------- pure-JAX reference (bf16-MXU emulated) ---------------

def mpnn_reference(x, edge_index, edge_attr, params, *, num_layers, emb_dim):
    """Reference forward; matmul operands rounded to bf16 like the kernel's MXU path."""
    f32, bf16 = jnp.float32, jnp.bfloat16

    def mm(a, w):
        return jnp.dot(a.astype(bf16), w.astype(bf16), preferred_element_type=f32)

    d = emb_dim
    h = mm(x, params["win"]) + params["bin"]
    src, dst = edge_index[:, 0], edge_index[:, 1]
    for l in range(num_layers):
        wm1 = params["wm1"][l]
        # kernel hoists the node projections per layer and stores them in bf16
        hw_i = mm(h, wm1[:d]).astype(bf16).astype(f32)
        hw_j = mm(h, wm1[d:2 * d]).astype(bf16).astype(f32)
        m = hw_i[dst] + hw_j[src] + mm(edge_attr, wm1[2 * d:]) + params["bm1"][l]
        m = jnp.maximum(m, 0.0)
        m = jnp.maximum(mm(m, params["wm2"][l]) + params["bm2"][l], 0.0)
        m_r = m.astype(bf16).astype(f32)          # scatter matmul rounds m
        aggr = jnp.zeros((h.shape[0], d), f32).at[dst].add(m_r)
        wu1 = params["wu1"][l]
        u = mm(h, wu1[:d]) + mm(aggr, wu1[d:]) + params["bu1"][l]
        u = jnp.maximum(u, 0.0)
        u = jnp.maximum(mm(u, params["wu2"][l]) + params["bu2"][l], 0.0)
        h = h + u
    return h


if __name__ == "__main__":
    NUM_LAYERS, EMB_DIM, INPUT_DIM, EDGE_DIM = 2, 32, 16, 8
    N_NODES, N_EDGES = 8, 16

    root = jax.random.PRNGKey(0)
    k_x, k_ei, k_ea, k_p = jax.random.split(root, 4)

    x = jax.random.normal(k_x, (N_NODES, INPUT_DIM), jnp.float32)
    edge_index = jax.random.randint(k_ei, (N_EDGES, 2), 0, N_NODES, jnp.int32)
    edge_attr = jax.random.normal(k_ea, (N_EDGES, EDGE_DIM), jnp.float32)
    params = init_params(k_p, NUM_LAYERS, EMB_DIM, INPUT_DIM, EDGE_DIM)

    out = mpnn_forward(x, edge_index, edge_attr, params,
                       num_layers=NUM_LAYERS, emb_dim=EMB_DIM)
    out = jax.block_until_ready(out)

    ref = mpnn_reference(x, edge_index, edge_attr, params,
                         num_layers=NUM_LAYERS, emb_dim=EMB_DIM)
    assert out.shape == (N_NODES, EMB_DIM)
    assert jnp.allclose(out, ref, atol=2e-3, rtol=2e-3), (
        float(jnp.max(jnp.abs(out - ref))))
    print("KERNEL_OK")
</pallas_src>

<mosaic_0001>
module attributes {stable_mosaic.version = 11 : i64} {
  func.func @mpnn_kernel(%arg0: i32, %arg1: i32, %arg2: memref<8x16xf32, #tpu.memory_space<vmem>>, %arg3: memref<16x1xi32, #tpu.memory_space<vmem>>, %arg4: memref<16x1xi32, #tpu.memory_space<vmem>>, %arg5: memref<1x16xi32, #tpu.memory_space<vmem>>, %arg6: memref<16x8xf32, #tpu.memory_space<vmem>>, %arg7: memref<16x128xbf16, #tpu.memory_space<vmem>>, %arg8: memref<1x128xf32, #tpu.memory_space<vmem>>, %arg9: memref<1x128x128xbf16, #tpu.memory_space<vmem>>, %arg10: memref<1x128x128xbf16, #tpu.memory_space<vmem>>, %arg11: memref<1x8x128xbf16, #tpu.memory_space<vmem>>, %arg12: memref<1x1x128xf32, #tpu.memory_space<vmem>>, %arg13: memref<1x128x128xbf16, #tpu.memory_space<vmem>>, %arg14: memref<1x1x128xf32, #tpu.memory_space<vmem>>, %arg15: memref<1x128x128xbf16, #tpu.memory_space<vmem>>, %arg16: memref<1x128x128xbf16, #tpu.memory_space<vmem>>, %arg17: memref<1x1x128xf32, #tpu.memory_space<vmem>>, %arg18: memref<1x128x128xbf16, #tpu.memory_space<vmem>>, %arg19: memref<1x1x128xf32, #tpu.memory_space<vmem>>, %arg20: memref<8x128xf32, #tpu.memory_space<vmem>>, %arg21: memref<8x128xf32, #tpu.memory_space<vmem>>, %arg22: memref<8x128xf32, #tpu.memory_space<vmem>>, %arg23: memref<8x128xbf16, #tpu.memory_space<vmem>>, %arg24: memref<8x128xbf16, #tpu.memory_space<vmem>>) attributes {dimension_semantics = [#tpu.dimension_semantics<arbitrary>, #tpu.dimension_semantics<arbitrary>], iteration_bounds = array<i64: 2, 1>, scalar_prefetch = 0 : i64, scratch_operands = 4 : i64, tpu.core_type = #tpu.core_type<tc>, window_params = [{pipeline_mode = #tpu.pipeline_mode<synchronous>, transform_indices = @transform_0, window_bounds = array<i64: 8, 16>}, {transform_indices = @transform_1, window_bounds = array<i64: 16, 1>}, {transform_indices = @transform_2, window_bounds = array<i64: 16, 1>}, {transform_indices = @transform_3, window_bounds = array<i64: 1, 16>}, {transform_indices = @transform_4, window_bounds = array<i64: 16, 8>}, {pipeline_mode = #tpu.pipeline_mode<synchronous>, transform_indices = @transform_5, window_bounds = array<i64: 16, 128>}, {pipeline_mode = #tpu.pipeline_mode<synchronous>, transform_indices = @transform_6, window_bounds = array<i64: 1, 128>}, {transform_indices = @transform_7, window_bounds = array<i64: 1, 128, 128>}, {transform_indices = @transform_8, window_bounds = array<i64: 1, 128, 128>}, {transform_indices = @transform_9, window_bounds = array<i64: 1, 8, 128>}, {transform_indices = @transform_10, window_bounds = array<i64: 1, 1, 128>}, {transform_indices = @transform_11, window_bounds = array<i64: 1, 128, 128>}, {transform_indices = @transform_12, window_bounds = array<i64: 1, 1, 128>}, {transform_indices = @transform_13, window_bounds = array<i64: 1, 128, 128>}, {transform_indices = @transform_14, window_bounds = array<i64: 1, 128, 128>}, {transform_indices = @transform_15, window_bounds = array<i64: 1, 1, 128>}, {transform_indices = @transform_16, window_bounds = array<i64: 1, 128, 128>}, {transform_indices = @transform_17, window_bounds = array<i64: 1, 1, 128>}, {pipeline_mode = #tpu.pipeline_mode<synchronous>, transform_indices = @transform_18, window_bounds = array<i64: 8, 128>}]} {
    %c0_i32 = arith.constant 0 : i32
    %0 = arith.cmpi eq, %arg0, %c0_i32 : i32
    %c0_i32_0 = arith.constant 0 : i32
    %1 = arith.cmpi eq, %arg1, %c0_i32_0 : i32
    %2 = arith.andi %0, %1 : i1
    %3 = arith.extui %2 : i1 to i32
    %c0_i32_1 = arith.constant 0 : i32
    %4 = arith.cmpi ne, %3, %c0_i32_1 : i32
    scf.if %4 {
      %c0_47 = arith.constant 0 : index
      %c0_48 = arith.constant 0 : index
      %71 = vector.load %arg2[%c0_47, %c0_48] : memref<8x16xf32, #tpu.memory_space<vmem>>, vector<8x16xf32>
      %72 = arith.truncf %71 : vector<8x16xf32> to vector<8x16xbf16>
      %c0_49 = arith.constant 0 : index
      %c0_50 = arith.constant 0 : index
      %73 = vector.load %arg7[%c0_49, %c0_50] : memref<16x128xbf16, #tpu.memory_space<vmem>>, vector<16x128xbf16>
      %cst_51 = arith.constant dense<0.000000e+00> : vector<8x128xf32>
      %74 = tpu.matmul %72, %73, %cst_51 {dimension_numbers = #tpu.dot_dimension_numbers<[1], [0], [0], [1], [0, 0, 1, 1], [], []>} : vector<8x16xbf16>, vector<16x128xbf16>, vector<8x128xf32> -> vector<8x128xf32>
      %c0_52 = arith.constant 0 : index
      %c0_53 = arith.constant 0 : index
      %75 = vector.load %arg8[%c0_52, %c0_53] : memref<1x128xf32, #tpu.memory_space<vmem>>, vector<1x128xf32>
      %76 = vector.broadcast %75 : vector<1x128xf32> to vector<8x128xf32>
      %77 = arith.addf %74, %76 : vector<8x128xf32>
      %c0_54 = arith.constant 0 : index
      %c0_55 = arith.constant 0 : index
      %78 = vector.load %arg21[%c0_54, %c0_55] : memref<8x128xf32, #tpu.memory_space<vmem>>, vector<8x128xf32>
      tpu.vector_store %arg21[%c0_54, %c0_55], %77 {strides = array<i32>} : memref<8x128xf32, #tpu.memory_space<vmem>>, vector<8x128xf32>,
    } else {
    }
    %c0_i32_2 = arith.constant 0 : i32
    %5 = arith.cmpi eq, %arg1, %c0_i32_2 : i32
    %6 = arith.extui %5 : i1 to i32
    %c0_i32_3 = arith.constant 0 : i32
    %7 = arith.cmpi ne, %6, %c0_i32_3 : i32
    scf.if %7 {
      %cst_47 = arith.constant 0.000000e+00 : f32
      %71 = vector.broadcast %cst_47 : f32 to vector<8x128xf32>
      %c0_48 = arith.constant 0 : index
      %c0_49 = arith.constant 0 : index
      %72 = vector.load %arg22[%c0_48, %c0_49] : memref<8x128xf32, #tpu.memory_space<vmem>>, vector<8x128xf32>
      tpu.vector_store %arg22[%c0_48, %c0_49], %71 {strides = array<i32>} : memref<8x128xf32, #tpu.memory_space<vmem>>, vector<8x128xf32>,
      %c0_50 = arith.constant 0 : index
      %c0_51 = arith.constant 0 : index
      %73 = vector.load %arg21[%c0_50, %c0_51] : memref<8x128xf32, #tpu.memory_space<vmem>>, vector<8x128xf32>
      %74 = arith.truncf %73 : vector<8x128xf32> to vector<8x128xbf16>
      %c0_52 = arith.constant 0 : index
      %c0_53 = arith.constant 0 : index
      %c0_54 = arith.constant 0 : index
      %75 = vector.load %arg9[%c0_52, %c0_53, %c0_54] : memref<1x128x128xbf16, #tpu.memory_space<vmem>>, vector<1x128x128xbf16>
      %76 = vector.shape_cast %75 : vector<1x128x128xbf16> to vector<128x128xbf16>
      %cst_55 = arith.constant dense<0.000000e+00> : vector<8x128xf32>
      %77 = tpu.matmul %74, %76, %cst_55 {dimension_numbers = #tpu.dot_dimension_numbers<[1], [0], [0], [1], [0, 0, 1, 1], [], []>} : vector<8x128xbf16>, vector<128x128xbf16>, vector<8x128xf32> -> vector<8x128xf32>
      %78 = arith.truncf %77 : vector<8x128xf32> to vector<8x128xbf16>
      %c0_56 = arith.constant 0 : index
      %c0_57 = arith.constant 0 : index
      %79 = vector.load %arg23[%c0_56, %c0_57] : memref<8x128xbf16, #tpu.memory_space<vmem>>, vector<8x128xbf16>
      tpu.vector_store %arg23[%c0_56, %c0_57], %78 {strides = array<i32>} : memref<8x128xbf16, #tpu.memory_space<vmem>>, vector<8x128xbf16>,
      %c0_58 = arith.constant 0 : index
      %c0_59 = arith.constant 0 : index
      %c0_60 = arith.constant 0 : index
      %80 = vector.load %arg10[%c0_58, %c0_59, %c0_60] : memref<1x128x128xbf16, #tpu.memory_space<vmem>>, vector<1x128x128xbf16>
      %81 = vector.shape_cast %80 : vector<1x128x128xbf16> to vector<128x128xbf16>
      %cst_61 = arith.constant dense<0.000000e+00> : vector<8x128xf32>
      %82 = tpu.matmul %74, %81, %cst_61 {dimension_numbers = #tpu.dot_dimension_numbers<[1], [0], [0], [1], [0, 0, 1, 1], [], []>} : vector<8x128xbf16>, vector<128x128xbf16>, vector<8x128xf32> -> vector<8x128xf32>
      %83 = arith.truncf %82 : vector<8x128xf32> to vector<8x128xbf16>
      %c0_62 = arith.constant 0 : index
      %c0_63 = arith.constant 0 : index
      %84 = vector.load %arg24[%c0_62, %c0_63] : memref<8x128xbf16, #tpu.memory_space<vmem>>, vector<8x128xbf16>
      tpu.vector_store %arg24[%c0_62, %c0_63], %83 {strides = array<i32>} : memref<8x128xbf16, #tpu.memory_space<vmem>>, vector<8x128xbf16>,
    } else {
    }
    %8 = tpu.iota {dimensions = array<i32: 1>} : vector<16x8xi32>
    %c0 = arith.constant 0 : index
    %c0_4 = arith.constant 0 : index
    %9 = vector.load %arg3[%c0, %c0_4] : memref<16x1xi32, #tpu.memory_space<vmem>>, vector<16x1xi32>
    %10 = vector.broadcast %9 : vector<16x1xi32> to vector<16x8xi32>
    %11 = arith.cmpi eq, %8, %10 : vector<16x8xi32>
    %cst = arith.constant 1.000000e+00 : f32
    %cst_5 = arith.constant 0.000000e+00 : f32
    %12 = vector.broadcast %cst : f32 to vector<16x8xf32>
    %13 = vector.broadcast %cst_5 : f32 to vector<16x8xf32>
    %14 = arith.select %11, %12, %13 : vector<16x8xi1>, vector<16x8xf32>
    %15 = arith.truncf %14 : vector<16x8xf32> to vector<16x8xbf16>
    %c0_6 = arith.constant 0 : index
    %c0_7 = arith.constant 0 : index
    %16 = vector.load %arg4[%c0_6, %c0_7] : memref<16x1xi32, #tpu.memory_space<vmem>>, vector<16x1xi32>
    %17 = vector.broadcast %16 : vector<16x1xi32> to vector<16x8xi32>
    %18 = arith.cmpi eq, %8, %17 : vector<16x8xi32>
    %cst_8 = arith.constant 1.000000e+00 : f32
    %cst_9 = arith.constant 0.000000e+00 : f32
    %19 = vector.broadcast %cst_8 : f32 to vector<16x8xf32>
    %20 = vector.broadcast %cst_9 : f32 to vector<16x8xf32>
    %21 = arith.select %18, %19, %20 : vector<16x8xi1>, vector<16x8xf32>
    %22 = arith.truncf %21 : vector<16x8xf32> to vector<16x8xbf16>
    %23 = tpu.iota {dimensions = array<i32: 0>} : vector<8x16xi32>
    %c0_10 = arith.constant 0 : index
    %c0_11 = arith.constant 0 : index
    %24 = vector.load %arg5[%c0_10, %c0_11] : memref<1x16xi32, #tpu.memory_space<vmem>>, vector<1x16xi32>
    %25 = vector.broadcast %24 : vector<1x16xi32> to vector<8x16xi32>
    %26 = arith.cmpi eq, %23, %25 : vector<8x16xi32>
    %cst_12 = arith.constant 1.000000e+00 : f32
    %cst_13 = arith.constant 0.000000e+00 : f32
    %27 = vector.broadcast %cst_12 : f32 to vector<8x16xf32>
    %28 = vector.broadcast %cst_13 : f32 to vector<8x16xf32>
    %29 = arith.select %26, %27, %28 : vector<8x16xi1>, vector<8x16xf32>
    %30 = arith.truncf %29 : vector<8x16xf32> to vector<8x16xbf16>
    %c0_14 = arith.constant 0 : index
    %c0_15 = arith.constant 0 : index
    %31 = vector.load %arg23[%c0_14, %c0_15] : memref<8x128xbf16, #tpu.memory_space<vmem>>, vector<8x128xbf16>
    %cst_16 = arith.constant dense<0.000000e+00> : vector<16x128xf32>
    %32 = tpu.matmul %22, %31, %cst_16 {dimension_numbers = #tpu.dot_dimension_numbers<[1], [0], [0], [1], [0, 0, 1, 1], [], []>} : vector<16x8xbf16>, vector<8x128xbf16>, vector<16x128xf32> -> vector<16x128xf32>
    %c0_17 = arith.constant 0 : index
    %c0_18 = arith.constant 0 : index
    %33 = vector.load %arg24[%c0_17, %c0_18] : memref<8x128xbf16, #tpu.memory_space<vmem>>, vector<8x128xbf16>
    %cst_19 = arith.constant dense<0.000000e+00> : vector<16x128xf32>
    %34 = tpu.matmul %15, %33, %cst_19 {dimension_numbers = #tpu.dot_dimension_numbers<[1], [0], [0], [1], [0, 0, 1, 1], [], []>} : vector<16x8xbf16>, vector<8x128xbf16>, vector<16x128xf32> -> vector<16x128xf32>
    %35 = arith.addf %32, %34 : vector<16x128xf32>
    %c0_20 = arith.constant 0 : index
    %c0_21 = arith.constant 0 : index
    %36 = vector.load %arg6[%c0_20, %c0_21] : memref<16x8xf32, #tpu.memory_space<vmem>>, vector<16x8xf32>
    %37 = arith.truncf %36 : vector<16x8xf32> to vector<16x8xbf16>
    %c0_22 = arith.constant 0 : index
    %c0_23 = arith.constant 0 : index
    %c0_24 = arith.constant 0 : index
    %38 = vector.load %arg11[%c0_22, %c0_23, %c0_24] : memref<1x8x128xbf16, #tpu.memory_space<vmem>>, vector<1x8x128xbf16>
    %39 = vector.shape_cast %38 : vector<1x8x128xbf16> to vector<8x128xbf16>
    %cst_25 = arith.constant dense<0.000000e+00> : vector<16x128xf32>
    %40 = tpu.matmul %37, %39, %cst_25 {dimension_numbers = #tpu.dot_dimension_numbers<[1], [0], [0], [1], [0, 0, 1, 1], [], []>} : vector<16x8xbf16>, vector<8x128xbf16>, vector<16x128xf32> -> vector<16x128xf32>
    %41 = arith.addf %35, %40 : vector<16x128xf32>
    %c0_26 = arith.constant 0 : index
    %c0_27 = arith.constant 0 : index
    %c0_28 = arith.constant 0 : index
    %42 = vector.load %arg12[%c0_26, %c0_27, %c0_28] : memref<1x1x128xf32, #tpu.memory_space<vmem>>, vector<1x1x128xf32>
    %43 = vector.shape_cast %42 : vector<1x1x128xf32> to vector<1x128xf32>
    %44 = vector.broadcast %43 : vector<1x128xf32> to vector<16x128xf32>
    %45 = arith.addf %41, %44 : vector<16x128xf32>
    %cst_29 = arith.constant 0.000000e+00 : f32
    %46 = vector.broadcast %cst_29 : f32 to vector<16x128xf32>
    %47 = arith.maximumf %45, %46 : vector<16x128xf32>
    %48 = arith.truncf %47 : vector<16x128xf32> to vector<16x128xbf16>
    %c0_30 = arith.constant 0 : index
    %c0_31 = arith.constant 0 : index
    %c0_32 = arith.constant 0 : index
    %49 = vector.load %arg13[%c0_30, %c0_31, %c0_32] : memref<1x128x128xbf16, #tpu.memory_space<vmem>>, vector<1x128x128xbf16>
    %50 = vector.shape_cast %49 : vector<1x128x128xbf16> to vector<128x128xbf16>
    %cst_33 = arith.constant dense<0.000000e+00> : vector<16x128xf32>
    %51 = tpu.matmul %48, %50, %cst_33 {dimension_numbers = #tpu.dot_dimension_numbers<[1], [0], [0], [1], [0, 0, 1, 1], [], []>} : vector<16x128xbf16>, vector<128x128xbf16>, vector<16x128xf32> -> vector<16x128xf32>
    %c0_34 = arith.constant 0 : index
    %c0_35 = arith.constant 0 : index
    %c0_36 = arith.constant 0 : index
    %52 = vector.load %arg14[%c0_34, %c0_35, %c0_36] : memref<1x1x128xf32, #tpu.memory_space<vmem>>, vector<1x1x128xf32>
    %53 = vector.shape_cast %52 : vector<1x1x128xf32> to vector<1x128xf32>
    %54 = vector.broadcast %53 : vector<1x128xf32> to vector<16x128xf32>
    %55 = arith.addf %51, %54 : vector<16x128xf32>
    %cst_37 = arith.constant 0.000000e+00 : f32
    %56 = vector.broadcast %cst_37 : f32 to vector<16x128xf32>
    %57 = arith.maximumf %55, %56 : vector<16x128xf32>
    %c0_38 = arith.constant 0 : index
    %c0_39 = arith.constant 0 : index
    %58 = vector.load %arg22[%c0_38, %c0_39] : memref<8x128xf32, #tpu.memory_space<vmem>>, vector<8x128xf32>
    %59 = arith.truncf %57 : vector<16x128xf32> to vector<16x128xbf16>
    %cst_40 = arith.constant dense<0.000000e+00> : vector<8x128xf32>
    %60 = tpu.matmul %30, %59, %cst_40 {dimension_numbers = #tpu.dot_dimension_numbers<[1], [0], [0], [1], [0, 0, 1, 1], [], []>} : vector<8x16xbf16>, vector<16x128xbf16>, vector<8x128xf32> -> vector<8x128xf32>
    %61 = arith.addf %58, %60 : vector<8x128xf32>
    %c0_41 = arith.constant 0 : index
    %c0_42 = arith.constant 0 : index
    %62 = vector.load %arg22[%c0_41, %c0_42] : memref<8x128xf32, #tpu.memory_space<vmem>>, vector<8x128xf32>
    tpu.vector_store %arg22[%c0_41, %c0_42], %61 {strides = array<i32>} : memref<8x128xf32, #tpu.memory_space<vmem>>, vector<8x128xf32>,
    %c0_i32_43 = arith.constant 0 : i32
    %63 = arith.cmpi eq, %arg1, %c0_i32_43 : i32
    %64 = arith.extui %63 : i1 to i32
    %c0_i32_44 = arith.constant 0 : i32
    %65 = arith.cmpi ne, %64, %c0_i32_44 : i32
    scf.if %65 {
      %c0_47 = arith.constant 0 : index
      %c0_48 = arith.constant 0 : index
      %71 = vector.load %arg21[%c0_47, %c0_48] : memref<8x128xf32, #tpu.memory_space<vmem>>, vector<8x128xf32>
      %72 = arith.truncf %71 : vector<8x128xf32> to vector<8x128xbf16>
      %c0_49 = arith.constant 0 : index
      %c0_50 = arith.constant 0 : index
      %c0_51 = arith.constant 0 : index
      %73 = vector.load %arg15[%c0_49, %c0_50, %c0_51] : memref<1x128x128xbf16, #tpu.memory_space<vmem>>, vector<1x128x128xbf16>
      %74 = vector.shape_cast %73 : vector<1x128x128xbf16> to vector<128x128xbf16>
      %cst_52 = arith.constant dense<0.000000e+00> : vector<8x128xf32>
      %75 = tpu.matmul %72, %74, %cst_52 {dimension_numbers = #tpu.dot_dimension_numbers<[1], [0], [0], [1], [0, 0, 1, 1], [], []>} : vector<8x128xbf16>, vector<128x128xbf16>, vector<8x128xf32> -> vector<8x128xf32>
      %c0_53 = arith.constant 0 : index
      %c0_54 = arith.constant 0 : index
      %76 = vector.load %arg22[%c0_53, %c0_54] : memref<8x128xf32, #tpu.memory_space<vmem>>, vector<8x128xf32>
      %77 = arith.truncf %76 : vector<8x128xf32> to vector<8x128xbf16>
      %c0_55 = arith.constant 0 : index
      %c0_56 = arith.constant 0 : index
      %c0_57 = arith.constant 0 : index
      %78 = vector.load %arg16[%c0_55, %c0_56, %c0_57] : memref<1x128x128xbf16, #tpu.memory_space<vmem>>, vector<1x128x128xbf16>
      %79 = vector.shape_cast %78 : vector<1x128x128xbf16> to vector<128x128xbf16>
      %cst_58 = arith.constant dense<0.000000e+00> : vector<8x128xf32>
      %80 = tpu.matmul %77, %79, %cst_58 {dimension_numbers = #tpu.dot_dimension_numbers<[1], [0], [0], [1], [0, 0, 1, 1], [], []>} : vector<8x128xbf16>, vector<128x128xbf16>, vector<8x128xf32> -> vector<8x128xf32>
      %81 = arith.addf %75, %80 : vector<8x128xf32>
      %c0_59 = arith.constant 0 : index
      %c0_60 = arith.constant 0 : index
      %c0_61 = arith.constant 0 : index
      %82 = vector.load %arg17[%c0_59, %c0_60, %c0_61] : memref<1x1x128xf32, #tpu.memory_space<vmem>>, vector<1x1x128xf32>
      %83 = vector.shape_cast %82 : vector<1x1x128xf32> to vector<1x128xf32>
      %84 = vector.broadcast %83 : vector<1x128xf32> to vector<8x128xf32>
      %85 = arith.addf %81, %84 : vector<8x128xf32>
      %cst_62 = arith.constant 0.000000e+00 : f32
      %86 = vector.broadcast %cst_62 : f32 to vector<8x128xf32>
      %87 = arith.maximumf %85, %86 : vector<8x128xf32>
      %88 = arith.truncf %87 : vector<8x128xf32> to vector<8x128xbf16>
      %c0_63 = arith.constant 0 : index
      %c0_64 = arith.constant 0 : index
      %c0_65 = arith.constant 0 : index
      %89 = vector.load %arg18[%c0_63, %c0_64, %c0_65] : memref<1x128x128xbf16, #tpu.memory_space<vmem>>, vector<1x128x128xbf16>
      %90 = vector.shape_cast %89 : vector<1x128x128xbf16> to vector<128x128xbf16>
      %cst_66 = arith.constant dense<0.000000e+00> : vector<8x128xf32>
      %91 = tpu.matmul %88, %90, %cst_66 {dimension_numbers = #tpu.dot_dimension_numbers<[1], [0], [0], [1], [0, 0, 1, 1], [], []>} : vector<8x128xbf16>, vector<128x128xbf16>, vector<8x128xf32> -> vector<8x128xf32>
      %c0_67 = arith.constant 0 : index
      %c0_68 = arith.constant 0 : index
      %c0_69 = arith.constant 0 : index
      %92 = vector.load %arg19[%c0_67, %c0_68, %c0_69] : memref<1x1x128xf32, #tpu.memory_space<vmem>>, vector<1x1x128xf32>
      %93 = vector.shape_cast %92 : vector<1x1x128xf32> to vector<1x128xf32>
      %94 = vector.broadcast %93 : vector<1x128xf32> to vector<8x128xf32>
      %95 = arith.addf %91, %94 : vector<8x128xf32>
      %cst_70 = arith.constant 0.000000e+00 : f32
      %96 = vector.broadcast %cst_70 : f32 to vector<8x128xf32>
      %97 = arith.maximumf %95, %96 : vector<8x128xf32>
      %98 = arith.addf %71, %97 : vector<8x128xf32>
      %c0_71 = arith.constant 0 : index
      %c0_72 = arith.constant 0 : index
      %99 = vector.load %arg21[%c0_71, %c0_72] : memref<8x128xf32, #tpu.memory_space<vmem>>, vector<8x128xf32>
      tpu.vector_store %arg21[%c0_71, %c0_72], %98 {strides = array<i32>} : memref<8x128xf32, #tpu.memory_space<vmem>>, vector<8x128xf32>,
    } else {
    }
    %c1_i32 = arith.constant 1 : i32
    %66 = arith.cmpi eq, %arg0, %c1_i32 : i32
    %c0_i32_45 = arith.constant 0 : i32
    %67 = arith.cmpi eq, %arg1, %c0_i32_45 : i32
    %68 = arith.andi %66, %67 : i1
    %69 = arith.extui %68 : i1 to i32
    %c0_i32_46 = arith.constant 0 : i32
    %70 = arith.cmpi ne, %69, %c0_i32_46 : i32
    scf.if %70 {
      %c0_47 = arith.constant 0 : index
      %c0_48 = arith.constant 0 : index
      %71 = vector.load %arg21[%c0_47, %c0_48] : memref<8x128xf32, #tpu.memory_space<vmem>>, vector<8x128xf32>
      %c0_49 = arith.constant 0 : index
      %c0_50 = arith.constant 0 : index
      %72 = vector.load %arg20[%c0_49, %c0_50] : memref<8x128xf32, #tpu.memory_space<vmem>>, vector<8x128xf32>
      tpu.vector_store %arg20[%c0_49, %c0_50], %71 {strides = array<i32>} : memref<8x128xf32, #tpu.memory_space<vmem>>, vector<8x128xf32>,
    } else {
    }
    return
  }
  func.func @transform_0(%arg0: i32, %arg1: i32) -> (i32, i32) {
    %c0_i32 = arith.constant 0 : i32
    %c0_i32_0 = arith.constant 0 : i32
    %c0_i32_1 = arith.constant 0 : i32
    return %c0_i32, %c0_i32_0 : i32, i32
  }
  func.func @transform_1(%arg0: i32, %arg1: i32) -> (i32, i32) {
    %c0_i32 = arith.constant 0 : i32
    %c0_i32_0 = arith.constant 0 : i32
    return %arg1, %c0_i32 : i32, i32
  }
  func.func @transform_2(%arg0: i32, %arg1: i32) -> (i32, i32) {
    %c0_i32 = arith.constant 0 : i32
    %c0_i32_0 = arith.constant 0 : i32
    return %arg1, %c0_i32 : i32, i32
  }
  func.func @transform_3(%arg0: i32, %arg1: i32) -> (i32, i32) {
    %c0_i32 = arith.constant 0 : i32
    %c0_i32_0 = arith.constant 0 : i32
    return %c0_i32, %arg1 : i32, i32
  }
  func.func @transform_4(%arg0: i32, %arg1: i32) -> (i32, i32) {
    %c0_i32 = arith.constant 0 : i32
    %c0_i32_0 = arith.constant 0 : i32
    return %arg1, %c0_i32 : i32, i32
  }
  func.func @transform_5(%arg0: i32, %arg1: i32) -> (i32, i32) {
    %c0_i32 = arith.constant 0 : i32
    %c0_i32_0 = arith.constant 0 : i32
    %c0_i32_1 = arith.constant 0 : i32
    return %c0_i32, %c0_i32_0 : i32, i32
  }
  func.func @transform_6(%arg0: i32, %arg1: i32) -> (i32, i32) {
    %c0_i32 = arith.constant 0 : i32
    %c0_i32_0 = arith.constant 0 : i32
    %c0_i32_1 = arith.constant 0 : i32
    return %c0_i32, %c0_i32_0 : i32, i32
  }
  func.func @transform_7(%arg0: i32, %arg1: i32) -> (i32, i32, i32) {
    %c0_i32 = arith.constant 0 : i32
    %c0_i32_0 = arith.constant 0 : i32
    %c0_i32_1 = arith.constant 0 : i32
    return %arg0, %c0_i32, %c0_i32_0 : i32, i32, i32
  }
  func.func @transform_8(%arg0: i32, %arg1: i32) -> (i32, i32, i32) {
    %c0_i32 = arith.constant 0 : i32
    %c0_i32_0 = arith.constant 0 : i32
    %c0_i32_1 = arith.constant 0 : i32
    return %arg0, %c0_i32, %c0_i32_0 : i32, i32, i32
  }
  func.func @transform_9(%arg0: i32, %arg1: i32) -> (i32, i32, i32) {
    %c0_i32 = arith.constant 0 : i32
    %c0_i32_0 = arith.constant 0 : i32
    %c0_i32_1 = arith.constant 0 : i32
    return %arg0, %c0_i32, %c0_i32_0 : i32, i32, i32
  }
  func.func @transform_10(%arg0: i32, %arg1: i32) -> (i32, i32, i32) {
    %c0_i32 = arith.constant 0 : i32
    %c0_i32_0 = arith.constant 0 : i32
    %c0_i32_1 = arith.constant 0 : i32
    return %arg0, %c0_i32, %c0_i32_0 : i32, i32, i32
  }
  func.func @transform_11(%arg0: i32, %arg1: i32) -> (i32, i32, i32) {
    %c0_i32 = arith.constant 0 : i32
    %c0_i32_0 = arith.constant 0 : i32
    %c0_i32_1 = arith.constant 0 : i32
    return %arg0, %c0_i32, %c0_i32_0 : i32, i32, i32
  }
  func.func @transform_12(%arg0: i32, %arg1: i32) -> (i32, i32, i32) {
    %c0_i32 = arith.constant 0 : i32
    %c0_i32_0 = arith.constant 0 : i32
    %c0_i32_1 = arith.constant 0 : i32
    return %arg0, %c0_i32, %c0_i32_0 : i32, i32, i32
  }
  func.func @transform_13(%arg0: i32, %arg1: i32) -> (i32, i32, i32) {
    %c0_i32 = arith.constant 0 : i32
    %c0_i32_0 = arith.constant 0 : i32
    %c0_i32_1 = arith.constant 0 : i32
    return %arg0, %c0_i32, %c0_i32_0 : i32, i32, i32
  }
  func.func @transform_14(%arg0: i32, %arg1: i32) -> (i32, i32, i32) {
    %c0_i32 = arith.constant 0 : i32
    %c0_i32_0 = arith.constant 0 : i32
    %c0_i32_1 = arith.constant 0 : i32
    return %arg0, %c0_i32, %c0_i32_0 : i32, i32, i32
  }
  func.func @transform_15(%arg0: i32, %arg1: i32) -> (i32, i32, i32) {
    %c0_i32 = arith.constant 0 : i32
    %c0_i32_0 = arith.constant 0 : i32
    %c0_i32_1 = arith.constant 0 : i32
    return %arg0, %c0_i32, %c0_i32_0 : i32, i32, i32
  }
  func.func @transform_16(%arg0: i32, %arg1: i32) -> (i32, i32, i32) {
    %c0_i32 = arith.constant 0 : i32
    %c0_i32_0 = arith.constant 0 : i32
    %c0_i32_1 = arith.constant 0 : i32
    return %arg0, %c0_i32, %c0_i32_0 : i32, i32, i32
  }
  func.func @transform_17(%arg0: i32, %arg1: i32) -> (i32, i32, i32) {
    %c0_i32 = arith.constant 0 : i32
    %c0_i32_0 = arith.constant 0 : i32
    %c0_i32_1 = arith.constant 0 : i32
    return %arg0, %c0_i32, %c0_i32_0 : i32, i32, i32
  }
  func.func @transform_18(%arg0: i32, %arg1: i32) -> (i32, i32) {
    %c0_i32 = arith.constant 0 : i32
    %c0_i32_0 = arith.constant 0 : i32
    %c0_i32_1 = arith.constant 0 : i32
    return %c0_i32, %c0_i32_0 : i32, i32
  }
}

</mosaic_0001>

<llo_original>
// kernel: tpu_custom_call.1
$region0: #{tpu_custom_call.1}
  #allocation0 [shape = 'u32[]', space=smem, size = 0x4, offset = 0x4, fixed_abs, tag = 'smem constant byte address 0x4 - core index']
  #allocation1 [shape = 'u32[144,128]{1,0:T(1,128)}', space=vmem, size = 0x12000, scoped, tag = 'internal scratch']
  #allocation2 [shape = 'f32[8,128]{1,0:T(8,128)}', space=vmem, size = 0x1000, scoped, tag = 'scratch operand']
  #allocation3 [shape = 'f32[8,128]{1,0:T(8,128)}', space=vmem, size = 0x1000, scoped, tag = 'scratch operand']
  #allocation4 [shape = 'bf16[8,128]{1,0:T(8,128)(2,1)}', space=vmem, size = 0x800, scoped, tag = 'scratch operand']
  #allocation5 [shape = 'bf16[8,128]{1,0:T(8,128)(2,1)}', space=vmem, size = 0x800, scoped, tag = 'scratch operand']
  %s0 = inlined_call_operand.vmem [shape: f32[8,16], index: 0, kind: input, shape index: {}]
  %s1 = inlined_call_operand.vmem [shape: s32[16,1], index: 1, kind: input, shape index: {}]
  %s2 = inlined_call_operand.vmem [shape: s32[16,1], index: 2, kind: input, shape index: {}]
  %s3 = inlined_call_operand.vmem [shape: s32[1,16], index: 3, kind: input, shape index: {}]
  %s4 = inlined_call_operand.vmem [shape: f32[16,8], index: 4, kind: input, shape index: {}]
  %s5 = inlined_call_operand.vmem [shape: bf16[16,128], index: 5, kind: input, shape index: {}]
  %s6 = inlined_call_operand.vmem [shape: f32[1,128], index: 6, kind: input, shape index: {}]
  %s7 = inlined_call_operand.hbm [shape: bf16[2,128,128], index: 7, kind: input, shape index: {}]
  %s8 = inlined_call_operand.hbm [shape: bf16[2,128,128], index: 8, kind: input, shape index: {}]
  %s9 = inlined_call_operand.vmem [shape: bf16[2,8,128], index: 9, kind: input, shape index: {}]
  %s10 = inlined_call_operand.vmem [shape: f32[2,1,128], index: 10, kind: input, shape index: {}]
  %s11 = inlined_call_operand.hbm [shape: bf16[2,128,128], index: 11, kind: input, shape index: {}]
  %s12 = inlined_call_operand.vmem [shape: f32[2,1,128], index: 12, kind: input, shape index: {}]
  %s13 = inlined_call_operand.hbm [shape: bf16[2,128,128], index: 13, kind: input, shape index: {}]
  %s14 = inlined_call_operand.hbm [shape: bf16[2,128,128], index: 14, kind: input, shape index: {}]
  %s15 = inlined_call_operand.vmem [shape: f32[2,1,128], index: 15, kind: input, shape index: {}]
  %s16 = inlined_call_operand.hbm [shape: bf16[2,128,128], index: 16, kind: input, shape index: {}]
  %s17 = inlined_call_operand.vmem [shape: f32[2,1,128], index: 17, kind: input, shape index: {}]
  %s18 = inlined_call_operand.hbm [shape: f32[8,128], index: 18, kind: output, shape index: {}]
  %s19 = sld [smem:[#allocation0]]
  $region145: #{tpu_custom_call.1} parent=0
    _
  %s21 = ssub.s32 1, %s19
  %s22 = scalar_select 0, %s21, %s19
  $region1: #{tpu_custom_call.1} parent=0
    #allocation6 [shape = 'u8[65536]{0}', space=vmem, size = 0x10000, scoped, tag = 'input window, operand 7']
    #allocation7 [shape = 's32[2]{0}', space=sflag, size = 0x8, scoped, tag = 'scoped memory for tpu_custom_call.1']
    #allocation8 [shape = 's32[2]{0}', space=sflag, size = 0x8, scoped, tag = 'scoped memory for tpu_custom_call.1']
    #allocation9 [shape = 'u8[65536]{0}', space=vmem, size = 0x10000, scoped, tag = 'input window, operand 8']
    #allocation10 [shape = 's32[2]{0}', space=sflag, size = 0x8, scoped, tag = 'scoped memory for tpu_custom_call.1']
    #allocation11 [shape = 'u8[65536]{0}', space=vmem, size = 0x10000, scoped, tag = 'input window, operand 11']
    #allocation12 [shape = 'u8[65536]{0}', space=vmem, size = 0x10000, scoped, tag = 'input window, operand 13']
    #allocation13 [shape = 's32[2]{0}', space=sflag, size = 0x8, scoped, tag = 'scoped memory for tpu_custom_call.1']
    #allocation14 [shape = 'u8[65536]{0}', space=vmem, size = 0x10000, scoped, tag = 'input window, operand 14']
    #allocation15 [shape = 'u8[65536]{0}', space=vmem, size = 0x10000, scoped, tag = 'input window, operand 16']
    #allocation16 [shape = 's32[2]{0}', space=sflag, size = 0x8, scoped, tag = 'scoped memory for tpu_custom_call.1']
    #allocation17 [shape = 'u8[4096]{0}', space=vmem, size = 0x1000, scoped, tag = 'output window, operand 0, single buffered']
    %23 = vsyncpa [#allocation7], 0
    %s24 = scalar_lea.sflag [#allocation7], 1
    %25 = vsyncpa %s24, 0
    %26 = vsyncpa [#allocation10], 0
    %s27 = scalar_lea.sflag [#allocation10], 1
    %28 = vsyncpa %s27, 0
    %29 = vsyncpa [#allocation13], 0
    %s30 = scalar_lea.sflag [#allocation13], 1
    %31 = vsyncpa %s30, 0
    %32 = vsyncpa [#allocation16], 0
    %s33 = scalar_lea.sflag [#allocation16], 1
    %34 = vsyncpa %s33, 0
    %35 = vsyncpa [#allocation8], 0
    loop: start=0, step=1, limit=4
    $region2: #{tpu_custom_call.1} parent=1 // loop_pre_header
      _
    $region3: #{tpu_custom_call.1} parent=1 // loop_header
      %s37 = sphi 0, %s41
      %p38 = scmp.ge.s32.totalorder %s37, 4
      %s44 = sphi 0, %s56
      %s45 = sphi 0, %s52
      %s46 = sphi 0, %s44
      %s47 = sphi 0, %s45
      %s48 = sphi 0, %s46
      %s49 = sphi 0, %s47
      %s57 = sphi 0, %s57
      %s59 = sphi 0, %s57
      %s60 = sphi 0, %s59
      %s74 = sphi 0, %s60
      %s80 = sphi 0, %s82
      %s83 = sphi 0, %s80
      %s84 = sphi 0, %s83
      %s100 = sphi 0, %s84
      %s106 = sphi 0, %s108
      %s109 = sphi 0, %s106
      %s110 = sphi 0, %s109
      %s126 = sphi 0, %s110
      %s132 = sphi 0, %s134
      %s135 = sphi 0, %s132
      %s136 = sphi 0, %s135
      %s152 = sphi 0, %s136
      %s158 = sphi 0, %s160
      %s161 = sphi 0, %s158
      %s162 = sphi 0, %s161
      %s178 = sphi 0, %s162
      %s182 = sphi 0, %s182
      %s184 = sphi 0, %s182
      %s185 = sphi 0, %s184
      %s199 = sphi 0, %s185
      %s203 = sphi 0, %s203
      %s205 = sphi 0, %s203
      %s206 = sphi 0, %s205
      %s220 = sphi 0, %s206
      %s226 = sphi 0, %s228
      %s229 = sphi 0, %s226
      %s230 = sphi 0, %s229
      %s246 = sphi 0, %s230
      %s252 = sphi 0, %s254
      %s255 = sphi 0, %s252
      %s256 = sphi 0, %s255
      %s272 = sphi 0, %s256
      %s278 = sphi 0, %s280
      %s281 = sphi 0, %s278
      %s282 = sphi 0, %s281
      %s298 = sphi 0, %s282
      %s304 = sphi 0, %s306
      %s307 = sphi 0, %s304
      %s308 = sphi 0, %s307
      %s324 = sphi 0, %s308
      %s330 = sphi 0, %s332
      %s333 = sphi 0, %s330
      %s334 = sphi 0, %s333
      %s350 = sphi 0, %s334
      %s356 = sphi 0, %s358
      %s359 = sphi 0, %s356
      %s360 = sphi 0, %s359
      %s376 = sphi 0, %s360
      %s382 = sphi 0, %s384
      %s385 = sphi 0, %s382
      %s386 = sphi 0, %s385
      %s402 = sphi 0, %s386
      %s408 = sphi 0, %s410
      %s411 = sphi 0, %s408
      %s412 = sphi 0, %s411
      %s428 = sphi 0, %s412
      %s434 = sphi 0, %s436
      %s437 = sphi 0, %s434
      %s438 = sphi 0, %s437
      %s454 = sphi 0, %s438
      %s460 = sphi 0, %s462
      %s463 = sphi 0, %s460
      %s464 = sphi 0, %s463
      %s480 = sphi 0, %s464
      %s486 = sphi 0, %s488
      %s489 = sphi 0, %s486
      %s490 = sphi 0, %s489
      %s506 = sphi 0, %s490
      %s510 = sphi 0, %s510
      %s512 = sphi 0, %s510
      %s513 = sphi 0, %s512
      %s527 = sphi 0, %s513
    $region4: #{tpu_custom_call.1} parent=1 // loop_header_branch
      %40 = sbr.rel (%p38) target = $region8
    $region5: #{tpu_custom_call.1} parent=1 // loop_body
      %s42 = ssub.s32 %s37, 1
      %s43 = ssub.s32 %s37, 2
      %s50 = sadd.s32 1, %s45
      %p51 = scmp.ge.s32.totalorder %s50, 1
      %s52 = scalar_select %p51, 0, %s50
      %s53 = sadd.s32 1, %s44
      %s54 = scalar_select %p51, %s53, %s44
      %p55 = scmp.ge.s32.totalorder %s54, 2
      %s56 = scalar_select %p55, 0, %s54
      %s58 = sadd.s32 %s57, 1
      %p61 = scmp.eq.s32.totalorder %s37, 1
      %p62 = scmp.ne.s32.totalorder %s57, %s59
      %p63 = scmp.eq.s32.totalorder %s37, 0
      %p64 = por %p62, %p63
      %p65 = scmp.ne.s32.totalorder %s57, %s59
      %p66 = scmp.eq.s32.totalorder %s42, 1
      %p67 = por %p65, %p66
      %p68 = scmp.ne.s32.totalorder %s59, %s60
      %p69 = scmp.eq.s32.totalorder %s42, 0
      %p70 = por %p68, %p69
      %p71 = scmp.ne.s32.totalorder %s59, %s60
      %p72 = scmp.eq.s32.totalorder %s43, 1
      %p73 = por %p71, %p72
      %p75 = scmp.ne.s32.totalorder %s60, %s74
      %p76 = scmp.eq.s32.totalorder %s43, 0
      %p77 = por %p75, %p76
      %s78 = ssub.s32 %s45, %s52
      %p79 = scmp.eq.s32.totalorder %s78, 0
      %s81 = sadd.s32 %s80, 1
      %s82 = scalar_select %p79, %s80, %s81
      %p85 = pneg %p79
      %p86 = scmp.eq.s32.totalorder %s37, 1
      %p87 = por %p85, %p86
      %p88 = scmp.ne.s32.totalorder %s80, %s83
      %p89 = scmp.eq.s32.totalorder %s37, 0
      %p90 = por %p88, %p89
      %p91 = scmp.ne.s32.totalorder %s80, %s83
      %p92 = scmp.eq.s32.totalorder %s42, 1
      %p93 = por %p91, %p92
      %p94 = scmp.ne.s32.totalorder %s83, %s84
      %p95 = scmp.eq.s32.totalorder %s42, 0
      %p96 = por %p94, %p95
      %p97 = scmp.ne.s32.totalorder %s83, %s84
      %p98 = scmp.eq.s32.totalorder %s43, 1
      %p99 = por %p97, %p98
      %p101 = scmp.ne.s32.totalorder %s84, %s100
      %p102 = scmp.eq.s32.totalorder %s43, 0
      %p103 = por %p101, %p102
      %s104 = ssub.s32 %s45, %s52
      %p105 = scmp.eq.s32.totalorder %s104, 0
      %s107 = sadd.s32 %s106, 1
      %s108 = scalar_select %p105, %s106, %s107
      %p111 = pneg %p105
      %p112 = scmp.eq.s32.totalorder %s37, 1
      %p113 = por %p111, %p112
      %p114 = scmp.ne.s32.totalorder %s106, %s109
      %p115 = scmp.eq.s32.totalorder %s37, 0
      %p116 = por %p114, %p115
      %p117 = scmp.ne.s32.totalorder %s106, %s109
      %p118 = scmp.eq.s32.totalorder %s42, 1
      %p119 = por %p117, %p118
      %p120 = scmp.ne.s32.totalorder %s109, %s110
      %p121 = scmp.eq.s32.totalorder %s42, 0
      %p122 = por %p120, %p121
      %p123 = scmp.ne.s32.totalorder %s109, %s110
      %p124 = scmp.eq.s32.totalorder %s43, 1
      %p125 = por %p123, %p124
      %p127 = scmp.ne.s32.totalorder %s110, %s126
      %p128 = scmp.eq.s32.totalorder %s43, 0
      %p129 = por %p127, %p128
      %s130 = ssub.s32 %s45, %s52
      %p131 = scmp.eq.s32.totalorder %s130, 0
      %s133 = sadd.s32 %s132, 1
      %s134 = scalar_select %p131, %s132, %s133
      %p137 = pneg %p131
      %p138 = scmp.eq.s32.totalorder %s37, 1
      %p139 = por %p137, %p138
      %p140 = scmp.ne.s32.totalorder %s132, %s135
      %p141 = scmp.eq.s32.totalorder %s37, 0
      %p142 = por %p140, %p141
      %p143 = scmp.ne.s32.totalorder %s132, %s135
      %p144 = scmp.eq.s32.totalorder %s42, 1
      %p145 = por %p143, %p144
      %p146 = scmp.ne.s32.totalorder %s135, %s136
      %p147 = scmp.eq.s32.totalorder %s42, 0
      %p148 = por %p146, %p147
      %p149 = scmp.ne.s32.totalorder %s135, %s136
      %p150 = scmp.eq.s32.totalorder %s43, 1
      %p151 = por %p149, %p150
      %p153 = scmp.ne.s32.totalorder %s136, %s152
      %p154 = scmp.eq.s32.totalorder %s43, 0
      %p155 = por %p153, %p154
      %s156 = ssub.s32 %s45, %s52
      %p157 = scmp.eq.s32.totalorder %s156, 0
      %s159 = sadd.s32 %s158, 1
      %s160 = scalar_select %p157, %s158, %s159
      %p163 = pneg %p157
      %p164 = scmp.eq.s32.totalorder %s37, 1
      %p165 = por %p163, %p164
      %p166 = scmp.ne.s32.totalorder %s158, %s161
      %p167 = scmp.eq.s32.totalorder %s37, 0
      %p168 = por %p166, %p167
      %p169 = scmp.ne.s32.totalorder %s158, %s161
      %p170 = scmp.eq.s32.totalorder %s42, 1
      %p171 = por %p169, %p170
      %p172 = scmp.ne.s32.totalorder %s161, %s162
      %p173 = scmp.eq.s32.totalorder %s42, 0
      %p174 = por %p172, %p173
      %p175 = scmp.ne.s32.totalorder %s161, %s162
      %p176 = scmp.eq.s32.totalorder %s43, 1
      %p177 = por %p175, %p176
      %p179 = scmp.ne.s32.totalorder %s162, %s178
      %p180 = scmp.eq.s32.totalorder %s43, 0
      %p181 = por %p179, %p180
      %s183 = sadd.s32 %s182, 1
      %p186 = scmp.eq.s32.totalorder %s37, 1
      %p187 = scmp.ne.s32.totalorder %s182, %s184
      %p188 = scmp.eq.s32.totalorder %s37, 0
      %p189 = por %p187, %p188
      %p190 = scmp.ne.s32.totalorder %s182, %s184
      %p191 = scmp.eq.s32.totalorder %s42, 1
      %p192 = por %p190, %p191
      %p193 = scmp.ne.s32.totalorder %s184, %s185
      %p194 = scmp.eq.s32.totalorder %s42, 0
      %p195 = por %p193, %p194
      %p196 = scmp.ne.s32.totalorder %s184, %s185
      %p197 = scmp.eq.s32.totalorder %s43, 1
      %p198 = por %p196, %p197
      %p200 = scmp.ne.s32.totalorder %s185, %s199
      %p201 = scmp.eq.s32.totalorder %s43, 0
      %p202 = por %p200, %p201
      %s204 = sadd.s32 %s203, 1
      %p207 = scmp.eq.s32.totalorder %s37, 1
      %p208 = scmp.ne.s32.totalorder %s203, %s205
      %p209 = scmp.eq.s32.totalorder %s37, 0
      %p210 = por %p208, %p209
      %p211 = scmp.ne.s32.totalorder %s203, %s205
      %p212 = scmp.eq.s32.totalorder %s42, 1
      %p213 = por %p211, %p212
      %p214 = scmp.ne.s32.totalorder %s205, %s206
      %p215 = scmp.eq.s32.totalorder %s42, 0
      %p216 = por %p214, %p215
      %p217 = scmp.ne.s32.totalorder %s205, %s206
      %p218 = scmp.eq.s32.totalorder %s43, 1
      %p219 = por %p217, %p218
      %p221 = scmp.ne.s32.totalorder %s206, %s220
      %p222 = scmp.eq.s32.totalorder %s43, 0
      %p223 = por %p221, %p222
      %s224 = ssub.s32 %s44, %s56
      %p225 = scmp.eq.s32.totalorder %s224, 0
      %s227 = sadd.s32 %s226, 1
      %s228 = scalar_select %p225, %s226, %s227
      %p231 = pneg %p225
      %p232 = scmp.eq.s32.totalorder %s37, 1
      %p233 = por %p231, %p232
      %p234 = scmp.ne.s32.totalorder %s226, %s229
      %p235 = scmp.eq.s32.totalorder %s37, 0
      %p236 = por %p234, %p235
      %p237 = scmp.ne.s32.totalorder %s226, %s229
      %p238 = scmp.eq.s32.totalorder %s42, 1
      %p239 = por %p237, %p238
      %p240 = scmp.ne.s32.totalorder %s229, %s230
      %p241 = scmp.eq.s32.totalorder %s42, 0
      %p242 = por %p240, %p241
      %p243 = scmp.ne.s32.totalorder %s229, %s230
      %p244 = scmp.eq.s32.totalorder %s43, 1
      %p245 = por %p243, %p244
      %p247 = scmp.ne.s32.totalorder %s230, %s246
      %p248 = scmp.eq.s32.totalorder %s43, 0
      %p249 = por %p247, %p248
      %s250 = ssub.s32 %s44, %s56
      %p251 = scmp.eq.s32.totalorder %s250, 0
      %s253 = sadd.s32 %s252, 1
      %s254 = scalar_select %p251, %s252, %s253
      %p257 = pneg %p251
      %p258 = scmp.eq.s32.totalorder %s37, 1
      %p259 = por %p257, %p258
      %p260 = scmp.ne.s32.totalorder %s252, %s255
      %p261 = scmp.eq.s32.totalorder %s37, 0
      %p262 = por %p260, %p261
      %p263 = scmp.ne.s32.totalorder %s252, %s255
      %p264 = scmp.eq.s32.totalorder %s42, 1
      %p265 = por %p263, %p264
      %p266 = scmp.ne.s32.totalorder %s255, %s256
      %p267 = scmp.eq.s32.totalorder %s42, 0
      %p268 = por %p266, %p267
      %p269 = scmp.ne.s32.totalorder %s255, %s256
      %p270 = scmp.eq.s32.totalorder %s43, 1
      %p271 = por %p269, %p270
      %p273 = scmp.ne.s32.totalorder %s256, %s272
      %p274 = scmp.eq.s32.totalorder %s43, 0
      %p275 = por %p273, %p274
      %s276 = ssub.s32 %s44, %s56
      %p277 = scmp.eq.s32.totalorder %s276, 0
      %s279 = sadd.s32 %s278, 1
      %s280 = scalar_select %p277, %s278, %s279
      %p283 = pneg %p277
      %p284 = scmp.eq.s32.totalorder %s37, 1
      %p285 = por %p283, %p284
      %p286 = scmp.ne.s32.totalorder %s278, %s281
      %p287 = scmp.eq.s32.totalorder %s37, 0
      %p288 = por %p286, %p287
      %p289 = scmp.ne.s32.totalorder %s278, %s281
      %p290 = scmp.eq.s32.totalorder %s42, 1
      %p291 = por %p289, %p290
      %p292 = scmp.ne.s32.totalorder %s281, %s282
      %p293 = scmp.eq.s32.totalorder %s42, 0
      %p294 = por %p292, %p293
      %p295 = scmp.ne.s32.totalorder %s281, %s282
      %p296 = scmp.eq.s32.totalorder %s43, 1
      %p297 = por %p295, %p296
      %p299 = scmp.ne.s32.totalorder %s282, %s298
      %p300 = scmp.eq.s32.totalorder %s43, 0
      %p301 = por %p299, %p300
      %s302 = ssub.s32 %s44, %s56
      %p303 = scmp.eq.s32.totalorder %s302, 0
      %s305 = sadd.s32 %s304, 1
      %s306 = scalar_select %p303, %s304, %s305
      %p309 = pneg %p303
      %p310 = scmp.eq.s32.totalorder %s37, 1
      %p311 = por %p309, %p310
      %p312 = scmp.ne.s32.totalorder %s304, %s307
      %p313 = scmp.eq.s32.totalorder %s37, 0
      %p314 = por %p312, %p313
      %p315 = scmp.ne.s32.totalorder %s304, %s307
      %p316 = scmp.eq.s32.totalorder %s42, 1
      %p317 = por %p315, %p316
      %p318 = scmp.ne.s32.totalorder %s307, %s308
      %p319 = scmp.eq.s32.totalorder %s42, 0
      %p320 = por %p318, %p319
      %p321 = scmp.ne.s32.totalorder %s307, %s308
      %p322 = scmp.eq.s32.totalorder %s43, 1
      %p323 = por %p321, %p322
      %p325 = scmp.ne.s32.totalorder %s308, %s324
      %p326 = scmp.eq.s32.totalorder %s43, 0
      %p327 = por %p325, %p326
      %s328 = ssub.s32 %s44, %s56
      %p329 = scmp.eq.s32.totalorder %s328, 0
      %s331 = sadd.s32 %s330, 1
      %s332 = scalar_select %p329, %s330, %s331
      %p335 = pneg %p329
      %p336 = scmp.eq.s32.totalorder %s37, 1
      %p337 = por %p335, %p336
      %p338 = scmp.ne.s32.totalorder %s330, %s333
      %p339 = scmp.eq.s32.totalorder %s37, 0
      %p340 = por %p338, %p339
      %p341 = scmp.ne.s32.totalorder %s330, %s333
      %p342 = scmp.eq.s32.totalorder %s42, 1
      %p343 = por %p341, %p342
      %p344 = scmp.ne.s32.totalorder %s333, %s334
      %p345 = scmp.eq.s32.totalorder %s42, 0
      %p346 = por %p344, %p345
      %p347 = scmp.ne.s32.totalorder %s333, %s334
      %p348 = scmp.eq.s32.totalorder %s43, 1
      %p349 = por %p347, %p348
      %p351 = scmp.ne.s32.totalorder %s334, %s350
      %p352 = scmp.eq.s32.totalorder %s43, 0
      %p353 = por %p351, %p352
      %s354 = ssub.s32 %s44, %s56
      %p355 = scmp.eq.s32.totalorder %s354, 0
      %s357 = sadd.s32 %s356, 1
      %s358 = scalar_select %p355, %s356, %s357
      %p361 = pneg %p355
      %p362 = scmp.eq.s32.totalorder %s37, 1
      %p363 = por %p361, %p362
      %p364 = scmp.ne.s32.totalorder %s356, %s359
      %p365 = scmp.eq.s32.totalorder %s37, 0
      %p366 = por %p364, %p365
      %p367 = scmp.ne.s32.totalorder %s356, %s359
      %p368 = scmp.eq.s32.totalorder %s42, 1
      %p369 = por %p367, %p368
      %p370 = scmp.ne.s32.totalorder %s359, %s360
      %p371 = scmp.eq.s32.totalorder %s42, 0
      %p372 = por %p370, %p371
      %p373 = scmp.ne.s32.totalorder %s359, %s360
      %p374 = scmp.eq.s32.totalorder %s43, 1
      %p375 = por %p373, %p374
      %p377 = scmp.ne.s32.totalorder %s360, %s376
      %p378 = scmp.eq.s32.totalorder %s43, 0
      %p379 = por %p377, %p378
      %s380 = ssub.s32 %s44, %s56
      %p381 = scmp.eq.s32.totalorder %s380, 0
      %s383 = sadd.s32 %s382, 1
      %s384 = scalar_select %p381, %s382, %s383
      %p387 = pneg %p381
      %p388 = scmp.eq.s32.totalorder %s37, 1
      %p389 = por %p387, %p388
      %p390 = scmp.ne.s32.totalorder %s382, %s385
      %p391 = scmp.eq.s32.totalorder %s37, 0
      %p392 = por %p390, %p391
      %p393 = scmp.ne.s32.totalorder %s382, %s385
      %p394 = scmp.eq.s32.totalorder %s42, 1
      %p395 = por %p393, %p394
      %p396 = scmp.ne.s32.totalorder %s385, %s386
      %p397 = scmp.eq.s32.totalorder %s42, 0
      %p398 = por %p396, %p397
      %p399 = scmp.ne.s32.totalorder %s385, %s386
      %p400 = scmp.eq.s32.totalorder %s43, 1
      %p401 = por %p399, %p400
      %p403 = scmp.ne.s32.totalorder %s386, %s402
      %p404 = scmp.eq.s32.totalorder %s43, 0
      %p405 = por %p403, %p404
      %s406 = ssub.s32 %s44, %s56
      %p407 = scmp.eq.s32.totalorder %s406, 0
      %s409 = sadd.s32 %s408, 1
      %s410 = scalar_select %p407, %s408, %s409
      %p413 = pneg %p407
      %p414 = scmp.eq.s32.totalorder %s37, 1
      %p415 = por %p413, %p414
      %p416 = scmp.ne.s32.totalorder %s408, %s411
      %p417 = scmp.eq.s32.totalorder %s37, 0
      %p418 = por %p416, %p417
      %p419 = scmp.ne.s32.totalorder %s408, %s411
      %p420 = scmp.eq.s32.totalorder %s42, 1
      %p421 = por %p419, %p420
      %p422 = scmp.ne.s32.totalorder %s411, %s412
      %p423 = scmp.eq.s32.totalorder %s42, 0
      %p424 = por %p422, %p423
      %p425 = scmp.ne.s32.totalorder %s411, %s412
      %p426 = scmp.eq.s32.totalorder %s43, 1
      %p427 = por %p425, %p426
      %p429 = scmp.ne.s32.totalorder %s412, %s428
      %p430 = scmp.eq.s32.totalorder %s43, 0
      %p431 = por %p429, %p430
      %s432 = ssub.s32 %s44, %s56
      %p433 = scmp.eq.s32.totalorder %s432, 0
      %s435 = sadd.s32 %s434, 1
      %s436 = scalar_select %p433, %s434, %s435
      %p439 = pneg %p433
      %p440 = scmp.eq.s32.totalorder %s37, 1
      %p441 = por %p439, %p440
      %p442 = scmp.ne.s32.totalorder %s434, %s437
      %p443 = scmp.eq.s32.totalorder %s37, 0
      %p444 = por %p442, %p443
      %p445 = scmp.ne.s32.totalorder %s434, %s437
      %p446 = scmp.eq.s32.totalorder %s42, 1
      %p447 = por %p445, %p446
      %p448 = scmp.ne.s32.totalorder %s437, %s438
      %p449 = scmp.eq.s32.totalorder %s42, 0
      %p450 = por %p448, %p449
      %p451 = scmp.ne.s32.totalorder %s437, %s438
      %p452 = scmp.eq.s32.totalorder %s43, 1
      %p453 = por %p451, %p452
      %p455 = scmp.ne.s32.totalorder %s438, %s454
      %p456 = scmp.eq.s32.totalorder %s43, 0
      %p457 = por %p455, %p456
      %s458 = ssub.s32 %s44, %s56
      %p459 = scmp.eq.s32.totalorder %s458, 0
      %s461 = sadd.s32 %s460, 1
      %s462 = scalar_select %p459, %s460, %s461
      %p465 = pneg %p459
      %p466 = scmp.eq.s32.totalorder %s37, 1
      %p467 = por %p465, %p466
      %p468 = scmp.ne.s32.totalorder %s460, %s463
      %p469 = scmp.eq.s32.totalorder %s37, 0
      %p470 = por %p468, %p469
      %p471 = scmp.ne.s32.totalorder %s460, %s463
      %p472 = scmp.eq.s32.totalorder %s42, 1
      %p473 = por %p471, %p472
      %p474 = scmp.ne.s32.totalorder %s463, %s464
      %p475 = scmp.eq.s32.totalorder %s42, 0
      %p476 = por %p474, %p475
      %p477 = scmp.ne.s32.totalorder %s463, %s464
      %p478 = scmp.eq.s32.totalorder %s43, 1
      %p479 = por %p477, %p478
      %p481 = scmp.ne.s32.totalorder %s464, %s480
      %p482 = scmp.eq.s32.totalorder %s43, 0
      %p483 = por %p481, %p482
      %s484 = ssub.s32 %s44, %s56
      %p485 = scmp.eq.s32.totalorder %s484, 0
      %s487 = sadd.s32 %s486, 1
      %s488 = scalar_select %p485, %s486, %s487
      %p491 = pneg %p485
      %p492 = scmp.eq.s32.totalorder %s37, 1
      %p493 = por %p491, %p492
      %p494 = scmp.ne.s32.totalorder %s486, %s489
      %p495 = scmp.eq.s32.totalorder %s37, 0
      %p496 = por %p494, %p495
      %p497 = scmp.ne.s32.totalorder %s486, %s489
      %p498 = scmp.eq.s32.totalorder %s42, 1
      %p499 = por %p497, %p498
      %p500 = scmp.ne.s32.totalorder %s489, %s490
      %p501 = scmp.eq.s32.totalorder %s42, 0
      %p502 = por %p500, %p501
      %p503 = scmp.ne.s32.totalorder %s489, %s490
      %p504 = scmp.eq.s32.totalorder %s43, 1
      %p505 = por %p503, %p504
      %p507 = scmp.ne.s32.totalorder %s490, %s506
      %p508 = scmp.eq.s32.totalorder %s43, 0
      %p509 = por %p507, %p508
      %s511 = sadd.s32 %s510, 1
      %p514 = scmp.eq.s32.totalorder %s37, 1
      %p515 = scmp.ne.s32.totalorder %s510, %s512
      %p516 = scmp.eq.s32.totalorder %s37, 0
      %p517 = por %p515, %p516
      %p518 = scmp.ne.s32.totalorder %s510, %s512
      %p519 = scmp.eq.s32.totalorder %s42, 1
      %p520 = por %p518, %p519
      %p521 = scmp.ne.s32.totalorder %s512, %s513
      %p522 = scmp.eq.s32.totalorder %s42, 0
      %p523 = por %p521, %p522
      %p524 = scmp.ne.s32.totalorder %s512, %s513
      %p525 = scmp.eq.s32.totalorder %s43, 1
      %p526 = por %p524, %p525
      %p528 = scmp.ne.s32.totalorder %s513, %s527
      %p529 = scmp.eq.s32.totalorder %s43, 0
      %p530 = por %p528, %p529
      %p531 = scmp.le.s32.totalorder 1, %s37
      %p532 = scmp.lt.s32.totalorder %s37, 3
      %p533 = pnand %p531, %p532
      %p534 = pneg %p533
      // Predicated region
      $region9: #{tpu_custom_call.1} parent=5 // pred_check
        _
      $region10: #{tpu_custom_call.1} parent=5 // pred_check_branch
        %536 = sbr.rel (%p533) target = $region12
      $region11: #{tpu_custom_call.1} parent=5 // pred_region
        %s537 = ssub.s32 %s37, 1
        // Predicated region
        $region13: #{tpu_custom_call.1} parent=11 // pred_check
          %p538 = pneg %p70
        $region14: #{tpu_custom_call.1} parent=11 // pred_check_branch
          %540 = sbr.rel (%p538) target = $region16
        $region15: #{tpu_custom_call.1} parent=11 // pred_region
          _
        $region16: #{tpu_custom_call.1} parent=11 // pred_fallthru
          _
        // Predicated region
        $region17: #{tpu_custom_call.1} parent=11 // pred_check
          %p541 = pneg %p96
        $region18: #{tpu_custom_call.1} parent=11 // pred_check_branch
          %543 = sbr.rel (%p541) target = $region20
        $region19: #{tpu_custom_call.1} parent=11 // pred_region
          %s544 = smul.u32 2, %s47
          %p545 = scmp.lt.s32.totalorder %s544, 1
          %s546 = scalar_select %p545, %s544, 1
          %s547 = smul.addr %s546, 8
          %s548 = scalar_lea.vmem %s1, %s547
          %s549 = smul.u32 2, %s47
        $region20: #{tpu_custom_call.1} parent=11 // pred_fallthru
          _
        // Predicated region
        $region21: #{tpu_custom_call.1} parent=11 // pred_check
          %p550 = pneg %p122
        $region22: #{tpu_custom_call.1} parent=11 // pred_check_branch
          %552 = sbr.rel (%p550) target = $region24
        $region23: #{tpu_custom_call.1} parent=11 // pred_region
          %s553 = smul.u32 2, %s47
          %p554 = scmp.lt.s32.totalorder %s553, 1
          %s555 = scalar_select %p554, %s553, 1
          %s556 = smul.addr %s555, 8
          %s557 = scalar_lea.vmem %s2, %s556
          %s558 = smul.u32 2, %s47
        $region24: #{tpu_custom_call.1} parent=11 // pred_fallthru
          _
        // Predicated region
        $region25: #{tpu_custom_call.1} parent=11 // pred_check
          %p559 = pneg %p148
        $region26: #{tpu_custom_call.1} parent=11 // pred_check_branch
          %561 = sbr.rel (%p559) target = $region28
        $region27: #{tpu_custom_call.1} parent=11 // pred_region
          %p562 = scmp.lt.s32.totalorder %s47, 0
          %s563 = scalar_select %p562, %s47, 0
          %s564 = scalar_lea.vmem %s3, %s563
        $region28: #{tpu_custom_call.1} parent=11 // pred_fallthru
          _
        // Predicated region
        $region29: #{tpu_custom_call.1} parent=11 // pred_check
          %p565 = pneg %p174
        $region30: #{tpu_custom_call.1} parent=11 // pred_check_branch
          %567 = sbr.rel (%p565) target = $region32
        $region31: #{tpu_custom_call.1} parent=11 // pred_region
          %s568 = smul.u32 2, %s47
          %p569 = scmp.lt.s32.totalorder %s568, 1
          %s570 = scalar_select %p569, %s568, 1
          %s571 = smul.addr %s570, 8
          %s572 = scalar_lea.vmem %s4, %s571
          %s573 = smul.u32 2, %s47
        $region32: #{tpu_custom_call.1} parent=11 // pred_fallthru
          _
        // Predicated region
        $region33: #{tpu_custom_call.1} parent=11 // pred_check
          %p574 = pneg %p195
        $region34: #{tpu_custom_call.1} parent=11 // pred_check_branch
          %576 = sbr.rel (%p574) target = $region36
        $region35: #{tpu_custom_call.1} parent=11 // pred_region
          _
        $region36: #{tpu_custom_call.1} parent=11 // pred_fallthru
          _
        // Predicated region
        $region37: #{tpu_custom_call.1} parent=11 // pred_check
          %p577 = pneg %p216
        $region38: #{tpu_custom_call.1} parent=11 // pred_check_branch
          %579 = sbr.rel (%p577) target = $region40
        $region39: #{tpu_custom_call.1} parent=11 // pred_region
          _
        $region40: #{tpu_custom_call.1} parent=11 // pred_fallthru
          _
      $region12: #{tpu_custom_call.1} parent=5 // pred_fallthru
        _
      %p580 = scmp.lt.s32.totalorder %s37, 2
      // Predicated region
      $region41: #{tpu_custom_call.1} parent=5 // pred_check
        %p581 = pneg %p580
      $region42: #{tpu_custom_call.1} parent=5 // pred_check_branch
        %583 = sbr.rel (%p581) target = $region44
      $region43: #{tpu_custom_call.1} parent=5 // pred_region
        // Predicated region
        $region45: #{tpu_custom_call.1} parent=43 // pred_check
          %p584 = pneg %p236
        $region46: #{tpu_custom_call.1} parent=43 // pred_check_branch
          %586 = sbr.rel (%p584) target = $region48
        $region47: #{tpu_custom_call.1} parent=43 // pred_region
          %s587 = sand.u32 %s226, 1
          %s588 = scalar_lea.sflag [#allocation7], %s587
          %s589 = sand.u32 %s226, 1
          %s590 = smul.addr %s589, 64
          %s591 = scalar_lea.vmem [#allocation6], %s590
          %s593 = ssub.s32 1024, 1024
          %594 = vsyncadd %s588, %s593
          %s595 = smul.addr %s44, 16
          %s596 = smul.addr %s595, 64
          %s597 = scalar_lea.hbm %s7, %s596
          %s598 = sshll.u32 %s591, 4
          %s599 = int_to_ptr.vmem [resolvable:$true] %s598
          %604 = dma.hbm_to_vmem [thread:$0]  %s597, 1024, %s599, %s588, 64, 64, 4
        $region48: #{tpu_custom_call.1} parent=43 // pred_fallthru
          _
        // Predicated region
        $region49: #{tpu_custom_call.1} parent=43 // pred_check
          %p605 = pneg %p262
        $region50: #{tpu_custom_call.1} parent=43 // pred_check_branch
          %607 = sbr.rel (%p605) target = $region52
        $region51: #{tpu_custom_call.1} parent=43 // pred_region
          %s608 = sand.u32 %s37, 1
          %s609 = scalar_lea.sflag [#allocation10], %s608
          %s610 = sand.u32 %s252, 1
          %s611 = smul.addr %s610, 64
          %s612 = scalar_lea.vmem [#allocation9], %s611
          %s614 = ssub.s32 1024, 1024
          %615 = vsyncadd %s609, %s614
          %s616 = smul.addr %s44, 16
          %s617 = smul.addr %s616, 64
          %s618 = scalar_lea.hbm %s8, %s617
          %s619 = sshll.u32 %s612, 4
          %s620 = int_to_ptr.vmem [resolvable:$true] %s619
          %625 = dma.hbm_to_vmem [thread:$0]  %s618, 1024, %s620, %s609, 64, 64, 4
        $region52: #{tpu_custom_call.1} parent=43 // pred_fallthru
          _
        // Predicated region
        $region53: #{tpu_custom_call.1} parent=43 // pred_check
          %p626 = pneg %p288
        $region54: #{tpu_custom_call.1} parent=43 // pred_check_branch
          %628 = sbr.rel (%p626) target = $region56
        $region55: #{tpu_custom_call.1} parent=43 // pred_region
          %p629 = scmp.lt.s32.totalorder %s44, 1
          %s630 = scalar_select %p629, %s44, 1
          %s631 = smul.addr %s630, 4
          %s632 = scalar_lea.vmem %s9, %s631
        $region56: #{tpu_custom_call.1} parent=43 // pred_fallthru
          _
        // Predicated region
        $region57: #{tpu_custom_call.1} parent=43 // pred_check
          %p633 = pneg %p314
        $region58: #{tpu_custom_call.1} parent=43 // pred_check_branch
          %635 = sbr.rel (%p633) target = $region60
        $region59: #{tpu_custom_call.1} parent=43 // pred_region
          %p636 = scmp.lt.s32.totalorder %s44, 1
          %s637 = scalar_select %p636, %s44, 1
          %s638 = scalar_lea.vmem %s10, %s637
        $region60: #{tpu_custom_call.1} parent=43 // pred_fallthru
          _
        // Predicated region
        $region61: #{tpu_custom_call.1} parent=43 // pred_check
          %p639 = pneg %p340
        $region62: #{tpu_custom_call.1} parent=43 // pred_check_branch
          %641 = sbr.rel (%p639) target = $region64
        $region63: #{tpu_custom_call.1} parent=43 // pred_region
          %s642 = sand.u32 %s37, 1
          %s643 = scalar_lea.sflag [#allocation10], %s642
          %s644 = sand.u32 %s330, 1
          %s645 = smul.addr %s644, 64
          %s646 = scalar_lea.vmem [#allocation11], %s645
          %s648 = ssub.s32 1024, 1024
          %649 = vsyncadd %s643, %s648
          %s650 = smul.addr %s44, 16
          %s651 = smul.addr %s650, 64
          %s652 = scalar_lea.hbm %s11, %s651
          %s653 = sshll.u32 %s646, 4
          %s654 = int_to_ptr.vmem [resolvable:$true] %s653
          %659 = dma.hbm_to_vmem [thread:$0]  %s652, 1024, %s654, %s643, 64, 64, 4
        $region64: #{tpu_custom_call.1} parent=43 // pred_fallthru
          _
        // Predicated region
        $region65: #{tpu_custom_call.1} parent=43 // pred_check
          %p660 = pneg %p366
        $region66: #{tpu_custom_call.1} parent=43 // pred_check_branch
          %662 = sbr.rel (%p660) target = $region68
        $region67: #{tpu_custom_call.1} parent=43 // pred_region
          %p663 = scmp.lt.s32.totalorder %s44, 1
          %s664 = scalar_select %p663, %s44, 1
          %s665 = scalar_lea.vmem %s12, %s664
        $region68: #{tpu_custom_call.1} parent=43 // pred_fallthru
          _
        // Predicated region
        $region69: #{tpu_custom_call.1} parent=43 // pred_check
          %p666 = pneg %p392
        $region70: #{tpu_custom_call.1} parent=43 // pred_check_branch
          %668 = sbr.rel (%p666) target = $region72
        $region71: #{tpu_custom_call.1} parent=43 // pred_region
          %s669 = sand.u32 %s37, 1
          %s670 = scalar_lea.sflag [#allocation13], %s669
          %s671 = sand.u32 %s382, 1
          %s672 = smul.addr %s671, 64
          %s673 = scalar_lea.vmem [#allocation12], %s672
          %s675 = ssub.s32 1024, 1024
          %676 = vsyncadd %s670, %s675
          %s677 = smul.addr %s44, 16
          %s678 = smul.addr %s677, 64
          %s679 = scalar_lea.hbm %s13, %s678
          %s680 = sshll.u32 %s673, 4
          %s681 = int_to_ptr.vmem [resolvable:$true] %s680
          %686 = dma.hbm_to_vmem [thread:$0]  %s679, 1024, %s681, %s670, 64, 64, 4
        $region72: #{tpu_custom_call.1} parent=43 // pred_fallthru
          _
        // Predicated region
        $region73: #{tpu_custom_call.1} parent=43 // pred_check
          %p687 = pneg %p418
        $region74: #{tpu_custom_call.1} parent=43 // pred_check_branch
          %689 = sbr.rel (%p687) target = $region76
        $region75: #{tpu_custom_call.1} parent=43 // pred_region
          %s690 = sand.u32 %s37, 1
          %s691 = scalar_lea.sflag [#allocation13], %s690
          %s692 = sand.u32 %s408, 1
          %s693 = smul.addr %s692, 64
          %s694 = scalar_lea.vmem [#allocation14], %s693
          %s696 = ssub.s32 1024, 1024
          %697 = vsyncadd %s691, %s696
          %s698 = smul.addr %s44, 16
          %s699 = smul.addr %s698, 64
          %s700 = scalar_lea.hbm %s14, %s699
          %s701 = sshll.u32 %s694, 4
          %s702 = int_to_ptr.vmem [resolvable:$true] %s701
          %707 = dma.hbm_to_vmem [thread:$0]  %s700, 1024, %s702, %s691, 64, 64, 4
        $region76: #{tpu_custom_call.1} parent=43 // pred_fallthru
          _
        // Predicated region
        $region77: #{tpu_custom_call.1} parent=43 // pred_check
          %p708 = pneg %p444
        $region78: #{tpu_custom_call.1} parent=43 // pred_check_branch
          %710 = sbr.rel (%p708) target = $region80
        $region79: #{tpu_custom_call.1} parent=43 // pred_region
          %p711 = scmp.lt.s32.totalorder %s44, 1
          %s712 = scalar_select %p711, %s44, 1
          %s713 = scalar_lea.vmem %s15, %s712
        $region80: #{tpu_custom_call.1} parent=43 // pred_fallthru
          _
        // Predicated region
        $region81: #{tpu_custom_call.1} parent=43 // pred_check
          %p714 = pneg %p470
        $region82: #{tpu_custom_call.1} parent=43 // pred_check_branch
          %716 = sbr.rel (%p714) target = $region84
        $region83: #{tpu_custom_call.1} parent=43 // pred_region
          %s717 = sand.u32 %s460, 1
          %s718 = scalar_lea.sflag [#allocation16], %s717
          %s719 = sand.u32 %s460, 1
          %s720 = smul.addr %s719, 64
          %s721 = scalar_lea.vmem [#allocation15], %s720
          %s723 = ssub.s32 1024, 1024
          %724 = vsyncadd %s718, %s723
          %s725 = smul.addr %s44, 16
          %s726 = smul.addr %s725, 64
          %s727 = scalar_lea.hbm %s16, %s726
          %s728 = sshll.u32 %s721, 4
          %s729 = int_to_ptr.vmem [resolvable:$true] %s728
          %734 = dma.hbm_to_vmem [thread:$0]  %s727, 1024, %s729, %s718, 64, 64, 4
        $region84: #{tpu_custom_call.1} parent=43 // pred_fallthru
          _
        // Predicated region
        $region85: #{tpu_custom_call.1} parent=43 // pred_check
          %p735 = pneg %p496
        $region86: #{tpu_custom_call.1} parent=43 // pred_check_branch
          %737 = sbr.rel (%p735) target = $region88
        $region87: #{tpu_custom_call.1} parent=43 // pred_region
          %p738 = scmp.lt.s32.totalorder %s44, 1
          %s739 = scalar_select %p738, %s44, 1
          %s740 = scalar_lea.vmem %s17, %s739
        $region88: #{tpu_custom_call.1} parent=43 // pred_fallthru
          _
      $region44: #{tpu_custom_call.1} parent=5 // pred_fallthru
        _
      %p741 = scmp.le.s32.totalorder 1, %s37
      %p742 = scmp.lt.s32.totalorder %s37, 3
      %p743 = pnand %p741, %p742
      %p744 = pneg %p743
      // Predicated region
      $region89: #{tpu_custom_call.1} parent=5 // pred_check
        _
      $region90: #{tpu_custom_call.1} parent=5 // pred_check_branch
        %746 = sbr.rel (%p743) target = $region92
      $region91: #{tpu_custom_call.1} parent=5 // pred_region
        %s747 = ssub.s32 %s37, 1
        %s748 = sand.u32 %s229, 1
        %s749 = scalar_lea.sflag [#allocation7], %s748
        %s750 = sand.u32 %s229, 1
        %s751 = smul.addr %s750, 64
        %s752 = scalar_lea.vmem [#allocation6], %s751
        // Predicated region
        $region93: #{tpu_custom_call.1} parent=91 // pred_check
          %p753 = pneg %p242
        $region94: #{tpu_custom_call.1} parent=91 // pred_check_branch
          %755 = sbr.rel (%p753) target = $region96
        $region95: #{tpu_custom_call.1} parent=91 // pred_region
          %756 = dma.done %s749, 1024
        $region96: #{tpu_custom_call.1} parent=91 // pred_fallthru
          _
        %s757 = sand.u32 %s42, 1
        %s758 = scalar_lea.sflag [#allocation10], %s757
        %s759 = sand.u32 %s255, 1
        %s760 = smul.addr %s759, 64
        %s761 = scalar_lea.vmem [#allocation9], %s760
        // Predicated region
        $region97: #{tpu_custom_call.1} parent=91 // pred_check
          %p762 = pneg %p268
        $region98: #{tpu_custom_call.1} parent=91 // pred_check_branch
          %764 = sbr.rel (%p762) target = $region100
        $region99: #{tpu_custom_call.1} parent=91 // pred_region
          %765 = dma.done %s758, 1024
        $region100: #{tpu_custom_call.1} parent=91 // pred_fallthru
          _
        %s766 = sand.u32 %s42, 1
        %s767 = scalar_lea.sflag [#allocation10], %s766
        %s768 = sand.u32 %s333, 1
        %s769 = smul.addr %s768, 64
        %s770 = scalar_lea.vmem [#allocation11], %s769
        // Predicated region
        $region101: #{tpu_custom_call.1} parent=91 // pred_check
          %p771 = pneg %p346
        $region102: #{tpu_custom_call.1} parent=91 // pred_check_branch
          %773 = sbr.rel (%p771) target = $region104
        $region103: #{tpu_custom_call.1} parent=91 // pred_region
          %774 = dma.done %s767, 1024
        $region104: #{tpu_custom_call.1} parent=91 // pred_fallthru
          _
        %s775 = sand.u32 %s42, 1
        %s776 = scalar_lea.sflag [#allocation13], %s775
        %s777 = sand.u32 %s385, 1
        %s778 = smul.addr %s777, 64
        %s779 = scalar_lea.vmem [#allocation12], %s778
        // Predicated region
        $region105: #{tpu_custom_call.1} parent=91 // pred_check
          %p780 = pneg %p398
        $region106: #{tpu_custom_call.1} parent=91 // pred_check_branch
          %782 = sbr.rel (%p780) target = $region108
        $region107: #{tpu_custom_call.1} parent=91 // pred_region
          %783 = dma.done %s776, 1024
        $region108: #{tpu_custom_call.1} parent=91 // pred_fallthru
          _
        %s784 = sand.u32 %s42, 1
        %s785 = scalar_lea.sflag [#allocation13], %s784
        %s786 = sand.u32 %s411, 1
        %s787 = smul.addr %s786, 64
        %s788 = scalar_lea.vmem [#allocation14], %s787
        // Predicated region
        $region109: #{tpu_custom_call.1} parent=91 // pred_check
          %p789 = pneg %p424
        $region110: #{tpu_custom_call.1} parent=91 // pred_check_branch
          %791 = sbr.rel (%p789) target = $region112
        $region111: #{tpu_custom_call.1} parent=91 // pred_region
          %792 = dma.done %s785, 1024
        $region112: #{tpu_custom_call.1} parent=91 // pred_fallthru
          _
        %s793 = sand.u32 %s463, 1
        %s794 = scalar_lea.sflag [#allocation16], %s793
        %s795 = sand.u32 %s463, 1
        %s796 = smul.addr %s795, 64
        %s797 = scalar_lea.vmem [#allocation15], %s796
        // Predicated region
        $region113: #{tpu_custom_call.1} parent=91 // pred_check
          %p798 = pneg %p476
        $region114: #{tpu_custom_call.1} parent=91 // pred_check_branch
          %800 = sbr.rel (%p798) target = $region116
        $region115: #{tpu_custom_call.1} parent=91 // pred_region
          %801 = dma.done %s794, 1024
        $region116: #{tpu_custom_call.1} parent=91 // pred_fallthru
          _
        %p802 = pneg %p70
        %p803 = pneg %p67
        %s804 = smul.u32 2, %s47
        %p805 = scmp.lt.s32.totalorder %s804, 1
        %s806 = scalar_select %p805, %s804, 1
        %s807 = smul.addr %s806, 8
        %s808 = scalar_lea.vmem %s1, %s807
        %p809 = pneg %p96
        %p810 = pneg %p93
        %s811 = smul.u32 2, %s47
        %p812 = scmp.lt.s32.totalorder %s811, 1
        %s813 = scalar_select %p812, %s811, 1
        %s814 = smul.addr %s813, 8
        %s815 = scalar_lea.vmem %s2, %s814
        %p816 = pneg %p122
        %p817 = pneg %p119
        %p818 = scmp.lt.s32.totalorder %s47, 0
        %s819 = scalar_select %p818, %s47, 0
        %s820 = scalar_lea.vmem %s3, %s819
        %p821 = pneg %p148
        %p822 = pneg %p145
        %s823 = smul.u32 2, %s47
        %p824 = scmp.lt.s32.totalorder %s823, 1
        %s825 = scalar_select %p824, %s823, 1
        %s826 = smul.addr %s825, 8
        %s827 = scalar_lea.vmem %s4, %s826
        %p828 = pneg %p174
        %p829 = pneg %p171
        %p830 = pneg %p195
        %p831 = pneg %p192
        %p832 = pneg %p216
        %p833 = pneg %p213
        %s834 = sand.u32 %s229, 1
        %s835 = scalar_lea.sflag [#allocation7], %s834
        %s836 = sand.u32 %s229, 1
        %s837 = smul.addr %s836, 64
        %s838 = scalar_lea.vmem [#allocation6], %s837
        %p839 = pneg %p242
        %p840 = pneg %p239
        %s841 = sand.u32 %s42, 1
        %s842 = scalar_lea.sflag [#allocation10], %s841
        %s843 = sand.u32 %s255, 1
        %s844 = smul.addr %s843, 64
        %s845 = scalar_lea.vmem [#allocation9], %s844
        %p846 = pneg %p268
        %p847 = pneg %p265
        %p848 = scmp.lt.s32.totalorder %s46, 1
        %s849 = scalar_select %p848, %s46, 1
        %s850 = smul.addr %s849, 4
        %s851 = scalar_lea.vmem %s9, %s850
        %p852 = pneg %p294
        %p853 = pneg %p291
        %p854 = scmp.lt.s32.totalorder %s46, 1
        %s855 = scalar_select %p854, %s46, 1
        %s856 = scalar_lea.vmem %s10, %s855
        %p857 = pneg %p320
        %p858 = pneg %p317
        %s859 = sand.u32 %s42, 1
        %s860 = scalar_lea.sflag [#allocation10], %s859
        %s861 = sand.u32 %s333, 1
        %s862 = smul.addr %s861, 64
        %s863 = scalar_lea.vmem [#allocation11], %s862
        %p864 = pneg %p346
        %p865 = pneg %p343
        %p866 = scmp.lt.s32.totalorder %s46, 1
        %s867 = scalar_select %p866, %s46, 1
        %s868 = scalar_lea.vmem %s12, %s867
        %p869 = pneg %p372
        %p870 = pneg %p369
        %s871 = sand.u32 %s42, 1
        %s872 = scalar_lea.sflag [#allocation13], %s871
        %s873 = sand.u32 %s385, 1
        %s874 = smul.addr %s873, 64
        %s875 = scalar_lea.vmem [#allocation12], %s874
        %p876 = pneg %p398
        %p877 = pneg %p395
        %s878 = sand.u32 %s42, 1
        %s879 = scalar_lea.sflag [#allocation13], %s878
        %s880 = sand.u32 %s411, 1
        %s881 = smul.addr %s880, 64
        %s882 = scalar_lea.vmem [#allocation14], %s881
        %p883 = pneg %p424
        %p884 = pneg %p421
        %p885 = scmp.lt.s32.totalorder %s46, 1
        %s886 = scalar_select %p885, %s46, 1
        %s887 = scalar_lea.vmem %s15, %s886
        %p888 = pneg %p450
        %p889 = pneg %p447
        %s890 = sand.u32 %s463, 1
        %s891 = scalar_lea.sflag [#allocation16], %s890
        %s892 = sand.u32 %s463, 1
        %s893 = smul.addr %s892, 64
        %s894 = scalar_lea.vmem [#allocation15], %s893
        %p895 = pneg %p476
        %p896 = pneg %p473
        %p897 = scmp.lt.s32.totalorder %s46, 1
        %s898 = scalar_select %p897, %s46, 1
        %s899 = scalar_lea.vmem %s17, %s898
        %p900 = pneg %p502
        %p901 = pneg %p499
        %p902 = pneg %p523
        %p903 = pneg %p520
        %s904 = smul.u32 2, %s47
        %p905 = scmp.lt.s32.totalorder %s904, 1
        %s906 = scalar_select %p905, %s904, 1
        %s907 = smul.addr %s906, 8
        %s908 = scalar_lea.vmem %s1, %s907
        %s909 = smul.u32 2, %s47
        %s910 = smul.u32 2, %s47
        %p911 = scmp.lt.s32.totalorder %s910, 1
        %s912 = scalar_select %p911, %s910, 1
        %s913 = smul.addr %s912, 8
        %s914 = scalar_lea.vmem %s2, %s913
        %s915 = smul.u32 2, %s47
        %p916 = scmp.lt.s32.totalorder %s47, 0
        %s917 = scalar_select %p916, %s47, 0
        %s918 = scalar_lea.vmem %s3, %s917
        %s919 = smul.u32 2, %s47
        %p920 = scmp.lt.s32.totalorder %s919, 1
        %s921 = scalar_select %p920, %s919, 1
        %s922 = smul.addr %s921, 8
        %s923 = scalar_lea.vmem %s4, %s922
        %s924 = smul.u32 2, %s47
        %p925 = scmp.lt.s32.totalorder %s46, 1
        %s926 = scalar_select %p925, %s46, 1
        %s927 = smul.addr %s926, 4
        %s928 = scalar_lea.vmem %s9, %s927
        %p929 = scmp.lt.s32.totalorder %s46, 1
        %s930 = scalar_select %p929, %s46, 1
        %s931 = scalar_lea.vmem %s10, %s930
        %p932 = scmp.lt.s32.totalorder %s46, 1
        %s933 = scalar_select %p932, %s46, 1
        %s934 = scalar_lea.vmem %s12, %s933
        %p935 = scmp.lt.s32.totalorder %s46, 1
        %s936 = scalar_select %p935, %s46, 1
        %s937 = scalar_lea.vmem %s15, %s936
        %p938 = scmp.lt.s32.totalorder %s46, 1
        %s939 = scalar_select %p938, %s46, 1
        %s940 = scalar_lea.vmem %s17, %s939
        %p942 = scmp.eq.s32.totalorder %s46, 0
        %p943 = scmp.eq.s32.totalorder %s47, 0
        %p944 = pnand %p942, %p943
        %p945 = pneg %p944
        // Predicated region
        $region117: #{tpu_custom_call.1} parent=91 // pred_check
          _
        $region118: #{tpu_custom_call.1} parent=91 // pred_check_branch
          %947 = sbr.rel (%p944) target = $region120
        $region119: #{tpu_custom_call.1} parent=91 // pred_region
          %v948 = vld [vmem:[%s0] sm:$0xff]
          %v949 = vpack.c.bf16 %v948, %v948
          %v950 = vld [vmem:[%s5] sm:$0xf]
          %v951 = vld [vmem:[%s5 + $0x4] sm:$0xf]
          %v952 = vld [vmem:[%s6] sm:$0x1]
          %v954 = vlaneseq
          %v955 = vshrl.u32 %v954, 7
          %v956 = vsub.s32 0, %v955
          %v957 = vrot.slane %v952, %v956
          %v961 = vunpack.c.l.b16 %v950
          %v962 = vunpack.c.l.b16 %v951
          %v963 = vpack.c.b16 %v962, %v961
          %vm965 = vcmask 130048
          %v967 = vsel %vm965, %v949, 0
          %969 = vmatprep.subr.bf16.mxu0 0
          %970 = vmatpush1.bf16.msra.mxu0 0
          %971 = vmatprep.subr.bf16.mxu0 0
          %972 = vmatpush1.bf16.msra.mxu0 0
          %973 = vmatprep.subr.bf16.mxu0 0
          %974 = vmatpush1.bf16.msra.mxu0 0
          %975 = vmatprep.subr.bf16.mxu0 0
          %976 = vmatpush1.bf16.msra.mxu0 0
          %977 = vmatprep.subr.bf16.mxu0 0
          %978 = vmatpush1.bf16.msra.mxu0 0
          %979 = vmatprep.subr.bf16.mxu0 0
          %980 = vmatpush1.bf16.msra.mxu0 0
          %981 = vmatprep.subr.bf16.mxu0 0
          %982 = vmatpush1.bf16.msra.mxu0 0
          %983 = vmatprep.subr.bf16.mxu0 0
          %984 = vmatpush1.bf16.msra.mxu0 %v963
          %985 = vmatprep.subr.bf16.mxu0 0
          %986 = vmatpush2.bf16.msra.mxu0 0
          %987 = vmatprep.subr.bf16.mxu0 0
          %988 = vmatpush2.bf16.msra.mxu0 0
          %989 = vmatprep.subr.bf16.mxu0 0
          %990 = vmatpush2.bf16.msra.mxu0 0
          %991 = vmatprep.subr.bf16.mxu0 0
          %992 = vmatpush2.bf16.msra.mxu0 0
          %993 = vmatprep.subr.bf16.mxu0 0
          %994 = vmatpush2.bf16.msra.mxu0 0
          %995 = vmatprep.subr.bf16.mxu0 0
          %996 = vmatpush2.bf16.msra.mxu0 0
          %997 = vmatprep.subr.bf16.mxu0 0
          %998 = vmatpush2.bf16.msra.mxu0 0
          %999 = vmatprep.subr.bf16.mxu0 0
          %1000 = vmatpush2.bf16.msra.mxu0 0
          %1001 = vmatprep.mubr.bf16.mxu0 0
          %1002 = vmatmul.mubr.bf16.gmra.mxu0 %v967
          %v1003 = vpop.f32.mrf.mxu0
          %v1004 = vadd.f32 %v957, %v1003
          %v1005 = vpop.f32.mrf.mxu0
          %v1006 = vpop.f32.mrf.mxu0
          %v1007 = vpop.f32.mrf.mxu0
          %1008 = vdwg.mxu0
          %1009 = vst [vmem:[#allocation2] sm:$0xff] %v1004
        $region120: #{tpu_custom_call.1} parent=91 // pred_fallthru
          _
        // Predicated region
        $region121: #{tpu_custom_call.1} parent=91 // pred_check
          %p1010 = pneg %p943
        $region122: #{tpu_custom_call.1} parent=91 // pred_check_branch
          %1012 = sbr.rel (%p1010) target = $region124
        $region123: #{tpu_custom_call.1} parent=91 // pred_region
          %1013 = vst [vmem:[#allocation3] sm:$0xff] 0.0
          %v1014 = vld [vmem:[#allocation2] sm:$0xff]
          %v1015 = vpack.c.bf16 %v1014, %v1014
          %v1016 = vld [vmem:[%s752] sm:$0xf]
          %v1017 = vld [vmem:[%s752 + $0x4] sm:$0xf]
          %v1018 = vld [vmem:[%s752 + $0x8] sm:$0xf]
          %v1019 = vld [vmem:[%s752 + $0xc] sm:$0xf]
          %v1020 = vld [vmem:[%s752 + $0x10] sm:$0xf]
          %v1021 = vld [vmem:[%s752 + $0x14] sm:$0xf]
          %v1022 = vld [vmem:[%s752 + $0x18] sm:$0xf]
          %v1023 = vld [vmem:[%s752 + $0x1c] sm:$0xf]
          %v1024 = vld [vmem:[%s752 + $0x20] sm:$0xf]
          %v1025 = vld [vmem:[%s752 + $0x24] sm:$0xf]
          %v1026 = vld [vmem:[%s752 + $0x28] sm:$0xf]
          %v1027 = vld [vmem:[%s752 + $0x2c] sm:$0xf]
          %v1028 = vld [vmem:[%s752 + $0x30] sm:$0xf]
          %v1029 = vld [vmem:[%s752 + $0x34] sm:$0xf]
          %v1030 = vld [vmem:[%s752 + $0x38] sm:$0xf]
          %v1031 = vld [vmem:[%s752 + $0x3c] sm:$0xf]
          %v1048 = vunpack.c.l.b16 %v1016
          %v1049 = vunpack.c.l.b16 %v1017
          %v1050 = vunpack.c.l.b16 %v1018
          %v1051 = vunpack.c.l.b16 %v1019
          %v1052 = vunpack.c.l.b16 %v1020
          %v1053 = vunpack.c.l.b16 %v1021
          %v1054 = vunpack.c.l.b16 %v1022
          %v1055 = vunpack.c.l.b16 %v1023
          %v1056 = vunpack.c.l.b16 %v1024
          %v1057 = vunpack.c.l.b16 %v1025
          %v1058 = vunpack.c.l.b16 %v1026
          %v1059 = vunpack.c.l.b16 %v1027
          %v1060 = vunpack.c.l.b16 %v1028
          %v1061 = vunpack.c.l.b16 %v1029
          %v1062 = vunpack.c.l.b16 %v1030
          %v1063 = vunpack.c.l.b16 %v1031
          %v1064 = vpack.c.b16 %v1049, %v1048
          %v1065 = vpack.c.b16 %v1051, %v1050
          %v1066 = vpack.c.b16 %v1053, %v1052
          %v1067 = vpack.c.b16 %v1055, %v1054
          %v1068 = vpack.c.b16 %v1057, %v1056
          %v1069 = vpack.c.b16 %v1059, %v1058
          %v1070 = vpack.c.b16 %v1061, %v1060
          %v1071 = vpack.c.b16 %v1063, %v1062
          %1080 = vmatprep.subr.bf16.mxu0 0
          %1081 = vmatpush1.bf16.msra.mxu0 %v1071
          %1082 = vmatprep.subr.bf16.mxu0 0
          %1083 = vmatpush1.bf16.msra.mxu0 %v1070
          %1084 = vmatprep.subr.bf16.mxu0 0
          %1085 = vmatpush1.bf16.msra.mxu0 %v1069
          %1086 = vmatprep.subr.bf16.mxu0 0
          %1087 = vmatpush1.bf16.msra.mxu0 %v1068
          %1088 = vmatprep.subr.bf16.mxu0 0
          %1089 = vmatpush1.bf16.msra.mxu0 %v1067
          %1090 = vmatprep.subr.bf16.mxu0 0
          %1091 = vmatpush1.bf16.msra.mxu0 %v1066
          %1092 = vmatprep.subr.bf16.mxu0 0
          %1093 = vmatpush1.bf16.msra.mxu0 %v1065
          %1094 = vmatprep.subr.bf16.mxu0 0
          %1095 = vmatpush1.bf16.msra.mxu0 %v1064
          %1096 = vmatprep.subr.bf16.mxu0 0
          %1097 = vmatpush2.bf16.msra.mxu0 0
          %1098 = vmatprep.subr.bf16.mxu0 0
          %1099 = vmatpush2.bf16.msra.mxu0 0
          %1100 = vmatprep.subr.bf16.mxu0 0
          %1101 = vmatpush2.bf16.msra.mxu0 0
          %1102 = vmatprep.subr.bf16.mxu0 0
          %1103 = vmatpush2.bf16.msra.mxu0 0
          %1104 = vmatprep.subr.bf16.mxu0 0
          %1105 = vmatpush2.bf16.msra.mxu0 0
          %1106 = vmatprep.subr.bf16.mxu0 0
          %1107 = vmatpush2.bf16.msra.mxu0 0
          %1108 = vmatprep.subr.bf16.mxu0 0
          %1109 = vmatpush2.bf16.msra.mxu0 0
          %1110 = vmatprep.subr.bf16.mxu0 0
          %1111 = vmatpush2.bf16.msra.mxu0 0
          %1112 = vmatprep.mubr.bf16.mxu0 0
          %1113 = vmatmul.mubr.bf16.gmra.mxu0 %v1015
          %v1114 = vpop.f32.mrf.mxu0
          %v1115 = vadd.f32 0.0, %v1114
          %v1116 = vpop.f32.mrf.mxu0
          %v1117 = vpop.f32.mrf.mxu0
          %v1118 = vpop.f32.mrf.mxu0
          %1119 = vdwg.mxu0
          %v1120 = vpack.c.bf16 %v1115, %v1115
          %1121 = vst [vmem:[#allocation4] sm:$0xf] %v1120
          %v1122 = vld [vmem:[%s761] sm:$0xf]
          %v1123 = vld [vmem:[%s761 + $0x4] sm:$0xf]
          %v1124 = vld [vmem:[%s761 + $0x8] sm:$0xf]
          %v1125 = vld [vmem:[%s761 + $0xc] sm:$0xf]
          %v1126 = vld [vmem:[%s761 + $0x10] sm:$0xf]
          %v1127 = vld [vmem:[%s761 + $0x14] sm:$0xf]
          %v1128 = vld [vmem:[%s761 + $0x18] sm:$0xf]
          %v1129 = vld [vmem:[%s761 + $0x1c] sm:$0xf]
          %v1130 = vld [vmem:[%s761 + $0x20] sm:$0xf]
          %v1131 = vld [vmem:[%s761 + $0x24] sm:$0xf]
          %v1132 = vld [vmem:[%s761 + $0x28] sm:$0xf]
          %v1133 = vld [vmem:[%s761 + $0x2c] sm:$0xf]
          %v1134 = vld [vmem:[%s761 + $0x30] sm:$0xf]
          %v1135 = vld [vmem:[%s761 + $0x34] sm:$0xf]
          %v1136 = vld [vmem:[%s761 + $0x38] sm:$0xf]
          %v1137 = vld [vmem:[%s761 + $0x3c] sm:$0xf]
          %v1154 = vunpack.c.l.b16 %v1122
          %v1155 = vunpack.c.l.b16 %v1123
          %v1156 = vunpack.c.l.b16 %v1124
          %v1157 = vunpack.c.l.b16 %v1125
          %v1158 = vunpack.c.l.b16 %v1126
          %v1159 = vunpack.c.l.b16 %v1127
          %v1160 = vunpack.c.l.b16 %v1128
          %v1161 = vunpack.c.l.b16 %v1129
          %v1162 = vunpack.c.l.b16 %v1130
          %v1163 = vunpack.c.l.b16 %v1131
          %v1164 = vunpack.c.l.b16 %v1132
          %v1165 = vunpack.c.l.b16 %v1133
          %v1166 = vunpack.c.l.b16 %v1134
          %v1167 = vunpack.c.l.b16 %v1135
          %v1168 = vunpack.c.l.b16 %v1136
          %v1169 = vunpack.c.l.b16 %v1137
          %v1170 = vpack.c.b16 %v1155, %v1154
          %v1171 = vpack.c.b16 %v1157, %v1156
          %v1172 = vpack.c.b16 %v1159, %v1158
          %v1173 = vpack.c.b16 %v1161, %v1160
          %v1174 = vpack.c.b16 %v1163, %v1162
          %v1175 = vpack.c.b16 %v1165, %v1164
          %v1176 = vpack.c.b16 %v1167, %v1166
          %v1177 = vpack.c.b16 %v1169, %v1168
          %1186 = vmatprep.subr.bf16.mxu0 0
          %1187 = vmatpush1.bf16.msra.mxu0 %v1177
          %1188 = vmatprep.subr.bf16.mxu0 0
          %1189 = vmatpush1.bf16.msra.mxu0 %v1176
          %1190 = vmatprep.subr.bf16.mxu0 0
          %1191 = vmatpush1.bf16.msra.mxu0 %v1175
          %1192 = vmatprep.subr.bf16.mxu0 0
          %1193 = vmatpush1.bf16.msra.mxu0 %v1174
          %1194 = vmatprep.subr.bf16.mxu0 0
          %1195 = vmatpush1.bf16.msra.mxu0 %v1173
          %1196 = vmatprep.subr.bf16.mxu0 0
          %1197 = vmatpush1.bf16.msra.mxu0 %v1172
          %1198 = vmatprep.subr.bf16.mxu0 0
          %1199 = vmatpush1.bf16.msra.mxu0 %v1171
          %1200 = vmatprep.subr.bf16.mxu0 0
          %1201 = vmatpush1.bf16.msra.mxu0 %v1170
          %1202 = vmatprep.subr.bf16.mxu0 0
          %1203 = vmatpush2.bf16.msra.mxu0 0
          %1204 = vmatprep.subr.bf16.mxu0 0
          %1205 = vmatpush2.bf16.msra.mxu0 0
          %1206 = vmatprep.subr.bf16.mxu0 0
          %1207 = vmatpush2.bf16.msra.mxu0 0
          %1208 = vmatprep.subr.bf16.mxu0 0
          %1209 = vmatpush2.bf16.msra.mxu0 0
          %1210 = vmatprep.subr.bf16.mxu0 0
          %1211 = vmatpush2.bf16.msra.mxu0 0
          %1212 = vmatprep.subr.bf16.mxu0 0
          %1213 = vmatpush2.bf16.msra.mxu0 0
          %1214 = vmatprep.subr.bf16.mxu0 0
          %1215 = vmatpush2.bf16.msra.mxu0 0
          %1216 = vmatprep.subr.bf16.mxu0 0
          %1217 = vmatpush2.bf16.msra.mxu0 0
          %1218 = vmatprep.mubr.bf16.mxu0 0
          %1219 = vmatmul.mubr.bf16.gmra.mxu0 %v1015
          %v1220 = vpop.f32.mrf.mxu0
          %v1221 = vadd.f32 0.0, %v1220
          %v1222 = vpop.f32.mrf.mxu0
          %v1223 = vpop.f32.mrf.mxu0
          %v1224 = vpop.f32.mrf.mxu0
          %1225 = vdwg.mxu0
          %v1226 = vpack.c.bf16 %v1221, %v1221
          %1227 = vst [vmem:[#allocation5] sm:$0xf] %v1226
        $region124: #{tpu_custom_call.1} parent=91 // pred_fallthru
          _
        %v1228 = vlaneseq
        %v1229 = vand.u32 %v1228, 127
        %v1230 = vld [vmem:[%s908] sm:$0xff]
        %v1231 = vld [vmem:[%s908 + $0x8] sm:$0xff]
        %1232 = vset.pattern.permute.xlu0 0
        %1233 = vperm.xlu0 %1232, %v1230
        %v1234 = vpop.permute.xlu0 %1233
        %1235 = vset.pattern.permute.xlu0 0
        %1236 = vperm.xlu0 %1235, %v1231
        %v1237 = vpop.permute.xlu0 %1236
        %vm1238 = vcmp.eq.s32.totalorder %v1229, %v1234
        %vm1239 = vcmp.eq.s32.totalorder %v1229, %v1237
        %v1240 = vsel %vm1238, 1.0, 0.0
        %v1241 = vsel %vm1239, 1.0, 0.0
        %v1242 = vpack.c.bf16 %v1241, %v1240
        %v1243 = vld [vmem:[%s914] sm:$0xff]
        %v1244 = vld [vmem:[%s914 + $0x8] sm:$0xff]
        %1245 = vset.pattern.permute.xlu0 0
        %1246 = vperm.xlu0 %1245, %v1243
        %v1247 = vpop.permute.xlu0 %1246
        %1248 = vset.pattern.permute.xlu0 0
        %1249 = vperm.xlu0 %1248, %v1244
        %v1250 = vpop.permute.xlu0 %1249
        %vm1251 = vcmp.eq.s32.totalorder %v1229, %v1247
        %vm1252 = vcmp.eq.s32.totalorder %v1229, %v1250
        %v1253 = vsel %vm1251, 1.0, 0.0
        %v1254 = vsel %vm1252, 1.0, 0.0
        %v1255 = vpack.c.bf16 %v1254, %v1253
        %v1256 = vlaneseq
        %v1257 = vshrl.u32 %v1256, 7
        %v1258 = vld [vmem:[%s918] sm:$0x1]
        %v1259 = vlaneseq
        %v1260 = vshrl.u32 %v1259, 7
        %v1261 = vsub.s32 0, %v1260
        %v1262 = vrot.slane %v1258, %v1261
        %vm1263 = vcmp.eq.s32.totalorder %v1257, %v1262
        %v1264 = vsel %vm1263, 1.0, 0.0
        %v1265 = vpack.c.bf16 %v1264, %v1264
        %v1266 = vld [vmem:[#allocation4] sm:$0xf]
        %v1267 = vld [vmem:[#allocation5] sm:$0xf]
        %vm1268 = vcmask 64512
        %v1270 = vsel %vm1268, %v1242, 0
        %vm1272 = vcmask 1043456
        %v1274 = vsel %vm1272, %v1267, 0
        %1276 = vmatprep.subr.bf16.mxu0 0
        %1277 = vmatpush1.bf16.msra.mxu0 0
        %1278 = vmatprep.subr.bf16.mxu0 0
        %1279 = vmatpush1.bf16.msra.mxu0 0
        %1280 = vmatprep.subr.bf16.mxu0 0
        %1281 = vmatpush1.bf16.msra.mxu0 0
        %1282 = vmatprep.subr.bf16.mxu0 0
        %1283 = vmatpush1.bf16.msra.mxu0 0
        %1284 = vmatprep.subr.bf16.mxu0 0
        %1285 = vmatpush1.bf16.msra.mxu0 0
        %1286 = vmatprep.subr.bf16.mxu0 0
        %1287 = vmatpush1.bf16.msra.mxu0 0
        %1288 = vmatprep.subr.bf16.mxu0 0
        %1289 = vmatpush1.bf16.msra.mxu0 0
        %1290 = vmatprep.subr.bf16.mxu0 0
        %1291 = vmatpush1.bf16.msra.mxu0 %v1274
        %1292 = vmatprep.subr.bf16.mxu0 0
        %1293 = vmatpush2.bf16.msra.mxu0 0
        %1294 = vmatprep.subr.bf16.mxu0 0
        %1295 = vmatpush2.bf16.msra.mxu0 0
        %1296 = vmatprep.subr.bf16.mxu0 0
        %1297 = vmatpush2.bf16.msra.mxu0 0
        %1298 = vmatprep.subr.bf16.mxu0 0
        %1299 = vmatpush2.bf16.msra.mxu0 0
        %1300 = vmatprep.subr.bf16.mxu0 0
        %1301 = vmatpush2.bf16.msra.mxu0 0
        %1302 = vmatprep.subr.bf16.mxu0 0
        %1303 = vmatpush2.bf16.msra.mxu0 0
        %1304 = vmatprep.subr.bf16.mxu0 0
        %1305 = vmatpush2.bf16.msra.mxu0 0
        %1306 = vmatprep.subr.bf16.mxu0 0
        %1307 = vmatpush2.bf16.msra.mxu0 0
        %1308 = vmatprep.mubr.bf16.mxu0 0
        %1309 = vmatmul.mubr.bf16.gmra.mxu0 %v1270
        %v1310 = vpop.f32.mrf.mxu0
        %v1311 = vadd.f32 0.0, %v1310
        %v1312 = vpop.f32.mrf.mxu0
        %v1313 = vpop.f32.mrf.mxu0
        %v1314 = vadd.f32 0.0, %v1313
        %v1315 = vpop.f32.mrf.mxu0
        %1316 = vdwg.mxu0
        %v1318 = vsel %vm1268, %v1255, 0
        %v1321 = vsel %vm1272, %v1266, 0
        %1323 = vmatprep.subr.bf16.mxu0 0
        %1324 = vmatpush1.bf16.msra.mxu0 0
        %1325 = vmatprep.subr.bf16.mxu0 0
        %1326 = vmatpush1.bf16.msra.mxu0 0
        %1327 = vmatprep.subr.bf16.mxu0 0
        %1328 = vmatpush1.bf16.msra.mxu0 0
        %1329 = vmatprep.subr.bf16.mxu0 0
        %1330 = vmatpush1.bf16.msra.mxu0 0
        %1331 = vmatprep.subr.bf16.mxu0 0
        %1332 = vmatpush1.bf16.msra.mxu0 0
        %1333 = vmatprep.subr.bf16.mxu0 0
        %1334 = vmatpush1.bf16.msra.mxu0 0
        %1335 = vmatprep.subr.bf16.mxu0 0
        %1336 = vmatpush1.bf16.msra.mxu0 0
        %1337 = vmatprep.subr.bf16.mxu0 0
        %1338 = vmatpush1.bf16.msra.mxu0 %v1321
        %1339 = vmatprep.subr.bf16.mxu0 0
        %1340 = vmatpush2.bf16.msra.mxu0 0
        %1341 = vmatprep.subr.bf16.mxu0 0
        %1342 = vmatpush2.bf16.msra.mxu0 0
        %1343 = vmatprep.subr.bf16.mxu0 0
        %1344 = vmatpush2.bf16.msra.mxu0 0
        %1345 = vmatprep.subr.bf16.mxu0 0
        %1346 = vmatpush2.bf16.msra.mxu0 0
        %1347 = vmatprep.subr.bf16.mxu0 0
        %1348 = vmatpush2.bf16.msra.mxu0 0
        %1349 = vmatprep.subr.bf16.mxu0 0
        %1350 = vmatpush2.bf16.msra.mxu0 0
        %1351 = vmatprep.subr.bf16.mxu0 0
        %1352 = vmatpush2.bf16.msra.mxu0 0
        %1353 = vmatprep.subr.bf16.mxu0 0
        %1354 = vmatpush2.bf16.msra.mxu0 0
        %1355 = vmatprep.mubr.bf16.mxu0 0
        %1356 = vmatmul.mubr.bf16.gmra.mxu0 %v1318
        %v1357 = vpop.f32.mrf.mxu0
        %v1358 = vadd.f32 %v1311, %v1357
        %v1359 = vpop.f32.mrf.mxu0
        %v1360 = vpop.f32.mrf.mxu0
        %v1361 = vadd.f32 %v1314, %v1360
        %v1362 = vpop.f32.mrf.mxu0
        %1363 = vdwg.mxu0
        %v1364 = vld [vmem:[%s923] sm:$0xff]
        %v1365 = vld [vmem:[%s923 + $0x8] sm:$0xff]
        %v1366 = vpack.c.bf16 %v1365, %v1364
        %v1367 = vld [vmem:[%s928] sm:$0xf]
        %v1369 = vsel %vm1268, %v1366, 0
        %v1372 = vsel %vm1272, %v1367, 0
        %1374 = vmatprep.subr.bf16.mxu0 0
        %1375 = vmatpush1.bf16.msra.mxu0 0
        %1376 = vmatprep.subr.bf16.mxu0 0
        %1377 = vmatpush1.bf16.msra.mxu0 0
        %1378 = vmatprep.subr.bf16.mxu0 0
        %1379 = vmatpush1.bf16.msra.mxu0 0
        %1380 = vmatprep.subr.bf16.mxu0 0
        %1381 = vmatpush1.bf16.msra.mxu0 0
        %1382 = vmatprep.subr.bf16.mxu0 0
        %1383 = vmatpush1.bf16.msra.mxu0 0
        %1384 = vmatprep.subr.bf16.mxu0 0
        %1385 = vmatpush1.bf16.msra.mxu0 0
        %1386 = vmatprep.subr.bf16.mxu0 0
        %1387 = vmatpush1.bf16.msra.mxu0 0
        %1388 = vmatprep.subr.bf16.mxu0 0
        %1389 = vmatpush1.bf16.msra.mxu0 %v1372
        %1390 = vmatprep.subr.bf16.mxu0 0
        %1391 = vmatpush2.bf16.msra.mxu0 0
        %1392 = vmatprep.subr.bf16.mxu0 0
        %1393 = vmatpush2.bf16.msra.mxu0 0
        %1394 = vmatprep.subr.bf16.mxu0 0
        %1395 = vmatpush2.bf16.msra.mxu0 0
        %1396 = vmatprep.subr.bf16.mxu0 0
        %1397 = vmatpush2.bf16.msra.mxu0 0
        %1398 = vmatprep.subr.bf16.mxu0 0
        %1399 = vmatpush2.bf16.msra.mxu0 0
        %1400 = vmatprep.subr.bf16.mxu0 0
        %1401 = vmatpush2.bf16.msra.mxu0 0
        %1402 = vmatprep.subr.bf16.mxu0 0
        %1403 = vmatpush2.bf16.msra.mxu0 0
        %1404 = vmatprep.subr.bf16.mxu0 0
        %1405 = vmatpush2.bf16.msra.mxu0 0
        %1406 = vmatprep.mubr.bf16.mxu0 0
        %1407 = vmatmul.mubr.bf16.gmra.mxu0 %v1369
        %v1408 = vpop.f32.mrf.mxu0
        %v1409 = vadd.f32 0.0, %v1408
        %v1410 = vpop.f32.mrf.mxu0
        %v1411 = vpop.f32.mrf.mxu0
        %v1412 = vadd.f32 0.0, %v1411
        %v1413 = vpop.f32.mrf.mxu0
        %1414 = vdwg.mxu0
        %v1415 = vadd.f32 %v1358, %v1409
        %v1416 = vadd.f32 %v1361, %v1412
        %v1417 = vld [vmem:[%s931] sm:$0x1]
        %v1419 = vlaneseq
        %v1420 = vshrl.u32 %v1419, 7
        %v1421 = vsub.s32 0, %v1420
        %v1422 = vrot.slane %v1417, %v1421
        %v1424 = vadd.f32 %v1415, %v1422
        %v1425 = vadd.f32 %v1416, %v1422
        %v1426 = vmax.f32 %v1424, 0.0
        %v1427 = vmax.f32 %v1425, 0.0
        %v1428 = vpack.c.bf16 %v1427, %v1426
        %v1429 = vld [vmem:[%s770] sm:$0xf]
        %v1430 = vld [vmem:[%s770 + $0x4] sm:$0xf]
        %v1431 = vld [vmem:[%s770 + $0x8] sm:$0xf]
        %v1432 = vld [vmem:[%s770 + $0xc] sm:$0xf]
        %v1433 = vld [vmem:[%s770 + $0x10] sm:$0xf]
        %v1434 = vld [vmem:[%s770 + $0x14] sm:$0xf]
        %v1435 = vld [vmem:[%s770 + $0x18] sm:$0xf]
        %v1436 = vld [vmem:[%s770 + $0x1c] sm:$0xf]
        %v1437 = vld [vmem:[%s770 + $0x20] sm:$0xf]
        %v1438 = vld [vmem:[%s770 + $0x24] sm:$0xf]
        %v1439 = vld [vmem:[%s770 + $0x28] sm:$0xf]
        %v1440 = vld [vmem:[%s770 + $0x2c] sm:$0xf]
        %v1441 = vld [vmem:[%s770 + $0x30] sm:$0xf]
        %v1442 = vld [vmem:[%s770 + $0x34] sm:$0xf]
        %v1443 = vld [vmem:[%s770 + $0x38] sm:$0xf]
        %v1444 = vld [vmem:[%s770 + $0x3c] sm:$0xf]
        %v1445 = vld [vmem:[%s934] sm:$0x1]
        %v1447 = vlaneseq
        %v1448 = vshrl.u32 %v1447, 7
        %v1449 = vsub.s32 0, %v1448
        %v1450 = vrot.slane %v1445, %v1449
        %v1468 = vunpack.c.l.b16 %v1429
        %v1469 = vunpack.c.l.b16 %v1430
        %v1470 = vunpack.c.l.b16 %v1431
        %v1471 = vunpack.c.l.b16 %v1432
        %v1472 = vunpack.c.l.b16 %v1433
        %v1473 = vunpack.c.l.b16 %v1434
        %v1474 = vunpack.c.l.b16 %v1435
        %v1475 = vunpack.c.l.b16 %v1436
        %v1476 = vunpack.c.l.b16 %v1437
        %v1477 = vunpack.c.l.b16 %v1438
        %v1478 = vunpack.c.l.b16 %v1439
        %v1479 = vunpack.c.l.b16 %v1440
        %v1480 = vunpack.c.l.b16 %v1441
        %v1481 = vunpack.c.l.b16 %v1442
        %v1482 = vunpack.c.l.b16 %v1443
        %v1483 = vunpack.c.l.b16 %v1444
        %v1484 = vpack.c.b16 %v1469, %v1468
        %v1485 = vpack.c.b16 %v1471, %v1470
        %v1486 = vpack.c.b16 %v1473, %v1472
        %v1487 = vpack.c.b16 %v1475, %v1474
        %v1488 = vpack.c.b16 %v1477, %v1476
        %v1489 = vpack.c.b16 %v1479, %v1478
        %v1490 = vpack.c.b16 %v1481, %v1480
        %v1491 = vpack.c.b16 %v1483, %v1482
        %1500 = vmatprep.subr.bf16.mxu0 0
        %1501 = vmatpush1.bf16.msra.mxu0 %v1491
        %1502 = vmatprep.subr.bf16.mxu0 0
        %1503 = vmatpush1.bf16.msra.mxu0 %v1490
        %1504 = vmatprep.subr.bf16.mxu0 0
        %1505 = vmatpush1.bf16.msra.mxu0 %v1489
        %1506 = vmatprep.subr.bf16.mxu0 0
        %1507 = vmatpush1.bf16.msra.mxu0 %v1488
        %1508 = vmatprep.subr.bf16.mxu0 0
        %1509 = vmatpush1.bf16.msra.mxu0 %v1487
        %1510 = vmatprep.subr.bf16.mxu0 0
        %1511 = vmatpush1.bf16.msra.mxu0 %v1486
        %1512 = vmatprep.subr.bf16.mxu0 0
        %1513 = vmatpush1.bf16.msra.mxu0 %v1485
        %1514 = vmatprep.subr.bf16.mxu0 0
        %1515 = vmatpush1.bf16.msra.mxu0 %v1484
        %1516 = vmatprep.subr.bf16.mxu0 0
        %1517 = vmatpush2.bf16.msra.mxu0 0
        %1518 = vmatprep.subr.bf16.mxu0 0
        %1519 = vmatpush2.bf16.msra.mxu0 0
        %1520 = vmatprep.subr.bf16.mxu0 0
        %1521 = vmatpush2.bf16.msra.mxu0 0
        %1522 = vmatprep.subr.bf16.mxu0 0
        %1523 = vmatpush2.bf16.msra.mxu0 0
        %1524 = vmatprep.subr.bf16.mxu0 0
        %1525 = vmatpush2.bf16.msra.mxu0 0
        %1526 = vmatprep.subr.bf16.mxu0 0
        %1527 = vmatpush2.bf16.msra.mxu0 0
        %1528 = vmatprep.subr.bf16.mxu0 0
        %1529 = vmatpush2.bf16.msra.mxu0 0
        %1530 = vmatprep.subr.bf16.mxu0 0
        %1531 = vmatpush2.bf16.msra.mxu0 0
        %1532 = vmatprep.mubr.bf16.mxu0 0
        %1533 = vmatmul.mubr.bf16.gmra.mxu0 %v1428
        %v1534 = vpop.f32.mrf.mxu0
        %v1535 = vadd.f32 %v1450, %v1534
        %v1536 = vpop.f32.mrf.mxu0
        %v1537 = vpop.f32.mrf.mxu0
        %v1538 = vadd.f32 %v1450, %v1537
        %v1539 = vpop.f32.mrf.mxu0
        %1540 = vdwg.mxu0
        %v1541 = vmax.f32 %v1535, 0.0
        %v1542 = vmax.f32 %v1538, 0.0
        %v1543 = vld [vmem:[#allocation3] sm:$0xff]
        %v1544 = vpack.c.bf16 %v1542, %v1541
        %vm1545 = vcmask 130048
        %v1547 = vsel %vm1545, %v1265, 0
        %1549 = vmatprep.subr.bf16.mxu0 0
        %1550 = vmatpush1.bf16.msra.mxu0 0
        %1551 = vmatprep.subr.bf16.mxu0 0
        %1552 = vmatpush1.bf16.msra.mxu0 0
        %1553 = vmatprep.subr.bf16.mxu0 0
        %1554 = vmatpush1.bf16.msra.mxu0 0
        %1555 = vmatprep.subr.bf16.mxu0 0
        %1556 = vmatpush1.bf16.msra.mxu0 0
        %1557 = vmatprep.subr.bf16.mxu0 0
        %1558 = vmatpush1.bf16.msra.mxu0 0
        %1559 = vmatprep.subr.bf16.mxu0 0
        %1560 = vmatpush1.bf16.msra.mxu0 0
        %1561 = vmatprep.subr.bf16.mxu0 0
        %1562 = vmatpush1.bf16.msra.mxu0 0
        %1563 = vmatprep.subr.bf16.mxu0 0
        %1564 = vmatpush1.bf16.msra.mxu0 %v1544
        %1565 = vmatprep.subr.bf16.mxu0 0
        %1566 = vmatpush2.bf16.msra.mxu0 0
        %1567 = vmatprep.subr.bf16.mxu0 0
        %1568 = vmatpush2.bf16.msra.mxu0 0
        %1569 = vmatprep.subr.bf16.mxu0 0
        %1570 = vmatpush2.bf16.msra.mxu0 0
        %1571 = vmatprep.subr.bf16.mxu0 0
        %1572 = vmatpush2.bf16.msra.mxu0 0
        %1573 = vmatprep.subr.bf16.mxu0 0
        %1574 = vmatpush2.bf16.msra.mxu0 0
        %1575 = vmatprep.subr.bf16.mxu0 0
        %1576 = vmatpush2.bf16.msra.mxu0 0
        %1577 = vmatprep.subr.bf16.mxu0 0
        %1578 = vmatpush2.bf16.msra.mxu0 0
        %1579 = vmatprep.subr.bf16.mxu0 0
        %1580 = vmatpush2.bf16.msra.mxu0 0
        %1581 = vmatprep.mubr.bf16.mxu0 0
        %1582 = vmatmul.mubr.bf16.gmra.mxu0 %v1547
        %v1583 = vpop.f32.mrf.mxu0
        %v1584 = vadd.f32 0.0, %v1583
        %v1585 = vpop.f32.mrf.mxu0
        %v1586 = vpop.f32.mrf.mxu0
        %v1587 = vpop.f32.mrf.mxu0
        %1588 = vdwg.mxu0
        %v1589 = vadd.f32 %v1543, %v1584
        %1590 = vst [vmem:[#allocation3] sm:$0xff] %v1589
        // Predicated region
        $region125: #{tpu_custom_call.1} parent=91 // pred_check
          %p1591 = pneg %p943
        $region126: #{tpu_custom_call.1} parent=91 // pred_check_branch
          %1593 = sbr.rel (%p1591) target = $region128
        $region127: #{tpu_custom_call.1} parent=91 // pred_region
          %v1594 = vld [vmem:[#allocation2] sm:$0xff]
          %v1595 = vpack.c.bf16 %v1594, %v1594
          %v1596 = vld [vmem:[%s779] sm:$0xf]
          %v1597 = vld [vmem:[%s779 + $0x4] sm:$0xf]
          %v1598 = vld [vmem:[%s779 + $0x8] sm:$0xf]
          %v1599 = vld [vmem:[%s779 + $0xc] sm:$0xf]
          %v1600 = vld [vmem:[%s779 + $0x10] sm:$0xf]
          %v1601 = vld [vmem:[%s779 + $0x14] sm:$0xf]
          %v1602 = vld [vmem:[%s779 + $0x18] sm:$0xf]
          %v1603 = vld [vmem:[%s779 + $0x1c] sm:$0xf]
          %v1604 = vld [vmem:[%s779 + $0x20] sm:$0xf]
          %v1605 = vld [vmem:[%s779 + $0x24] sm:$0xf]
          %v1606 = vld [vmem:[%s779 + $0x28] sm:$0xf]
          %v1607 = vld [vmem:[%s779 + $0x2c] sm:$0xf]
          %v1608 = vld [vmem:[%s779 + $0x30] sm:$0xf]
          %v1609 = vld [vmem:[%s779 + $0x34] sm:$0xf]
          %v1610 = vld [vmem:[%s779 + $0x38] sm:$0xf]
          %v1611 = vld [vmem:[%s779 + $0x3c] sm:$0xf]
          %v1612 = vld [vmem:[#allocation3] sm:$0xff]
          %v1613 = vpack.c.bf16 %v1612, %v1612
          %v1614 = vld [vmem:[%s788] sm:$0xf]
          %v1615 = vld [vmem:[%s788 + $0x4] sm:$0xf]
          %v1616 = vld [vmem:[%s788 + $0x8] sm:$0xf]
          %v1617 = vld [vmem:[%s788 + $0xc] sm:$0xf]
          %v1618 = vld [vmem:[%s788 + $0x10] sm:$0xf]
          %v1619 = vld [vmem:[%s788 + $0x14] sm:$0xf]
          %v1620 = vld [vmem:[%s788 + $0x18] sm:$0xf]
          %v1621 = vld [vmem:[%s788 + $0x1c] sm:$0xf]
          %v1622 = vld [vmem:[%s788 + $0x20] sm:$0xf]
          %v1623 = vld [vmem:[%s788 + $0x24] sm:$0xf]
          %v1624 = vld [vmem:[%s788 + $0x28] sm:$0xf]
          %v1625 = vld [vmem:[%s788 + $0x2c] sm:$0xf]
          %v1626 = vld [vmem:[%s788 + $0x30] sm:$0xf]
          %v1627 = vld [vmem:[%s788 + $0x34] sm:$0xf]
          %v1628 = vld [vmem:[%s788 + $0x38] sm:$0xf]
          %v1629 = vld [vmem:[%s788 + $0x3c] sm:$0xf]
          %v1646 = vunpack.c.l.b16 %v1614
          %v1647 = vunpack.c.l.b16 %v1615
          %v1648 = vunpack.c.l.b16 %v1616
          %v1649 = vunpack.c.l.b16 %v1617
          %v1650 = vunpack.c.l.b16 %v1618
          %v1651 = vunpack.c.l.b16 %v1619
          %v1652 = vunpack.c.l.b16 %v1620
          %v1653 = vunpack.c.l.b16 %v1621
          %v1654 = vunpack.c.l.b16 %v1622
          %v1655 = vunpack.c.l.b16 %v1623
          %v1656 = vunpack.c.l.b16 %v1624
          %v1657 = vunpack.c.l.b16 %v1625
          %v1658 = vunpack.c.l.b16 %v1626
          %v1659 = vunpack.c.l.b16 %v1627
          %v1660 = vunpack.c.l.b16 %v1628
          %v1661 = vunpack.c.l.b16 %v1629
          %v1662 = vpack.c.b16 %v1647, %v1646
          %v1663 = vpack.c.b16 %v1649, %v1648
          %v1664 = vpack.c.b16 %v1651, %v1650
          %v1665 = vpack.c.b16 %v1653, %v1652
          %v1666 = vpack.c.b16 %v1655, %v1654
          %v1667 = vpack.c.b16 %v1657, %v1656
          %v1668 = vpack.c.b16 %v1659, %v1658
          %v1669 = vpack.c.b16 %v1661, %v1660
          %1678 = vmatprep.subr.bf16.mxu0 0
          %1679 = vmatpush1.bf16.msra.mxu0 %v1669
          %1680 = vmatprep.subr.bf16.mxu0 0
          %1681 = vmatpush1.bf16.msra.mxu0 %v1668
          %1682 = vmatprep.subr.bf16.mxu0 0
          %1683 = vmatpush1.bf16.msra.mxu0 %v1667
          %1684 = vmatprep.subr.bf16.mxu0 0
          %1685 = vmatpush1.bf16.msra.mxu0 %v1666
          %1686 = vmatprep.subr.bf16.mxu0 0
          %1687 = vmatpush1.bf16.msra.mxu0 %v1665
          %1688 = vmatprep.subr.bf16.mxu0 0
          %1689 = vmatpush1.bf16.msra.mxu0 %v1664
          %1690 = vmatprep.subr.bf16.mxu0 0
          %1691 = vmatpush1.bf16.msra.mxu0 %v1663
          %1692 = vmatprep.subr.bf16.mxu0 0
          %1693 = vmatpush1.bf16.msra.mxu0 %v1662
          %1694 = vmatprep.subr.bf16.mxu0 0
          %1695 = vmatpush2.bf16.msra.mxu0 0
          %1696 = vmatprep.subr.bf16.mxu0 0
          %1697 = vmatpush2.bf16.msra.mxu0 0
          %1698 = vmatprep.subr.bf16.mxu0 0
          %1699 = vmatpush2.bf16.msra.mxu0 0
          %1700 = vmatprep.subr.bf16.mxu0 0
          %1701 = vmatpush2.bf16.msra.mxu0 0
          %1702 = vmatprep.subr.bf16.mxu0 0
          %1703 = vmatpush2.bf16.msra.mxu0 0
          %1704 = vmatprep.subr.bf16.mxu0 0
          %1705 = vmatpush2.bf16.msra.mxu0 0
          %1706 = vmatprep.subr.bf16.mxu0 0
          %1707 = vmatpush2.bf16.msra.mxu0 0
          %1708 = vmatprep.subr.bf16.mxu0 0
          %1709 = vmatpush2.bf16.msra.mxu0 0
          %1710 = vmatprep.mubr.bf16.mxu0 0
          %1711 = vmatmul.mubr.bf16.gmra.mxu0 %v1613
          %v1712 = vpop.f32.mrf.mxu0
          %v1713 = vadd.f32 0.0, %v1712
          %v1714 = vpop.f32.mrf.mxu0
          %v1715 = vpop.f32.mrf.mxu0
          %v1716 = vpop.f32.mrf.mxu0
          %1717 = vdwg.mxu0
          %v1734 = vunpack.c.l.b16 %v1596
          %v1735 = vunpack.c.l.b16 %v1597
          %v1736 = vunpack.c.l.b16 %v1598
          %v1737 = vunpack.c.l.b16 %v1599
          %v1738 = vunpack.c.l.b16 %v1600
          %v1739 = vunpack.c.l.b16 %v1601
          %v1740 = vunpack.c.l.b16 %v1602
          %v1741 = vunpack.c.l.b16 %v1603
          %v1742 = vunpack.c.l.b16 %v1604
          %v1743 = vunpack.c.l.b16 %v1605
          %v1744 = vunpack.c.l.b16 %v1606
          %v1745 = vunpack.c.l.b16 %v1607
          %v1746 = vunpack.c.l.b16 %v1608
          %v1747 = vunpack.c.l.b16 %v1609
          %v1748 = vunpack.c.l.b16 %v1610
          %v1749 = vunpack.c.l.b16 %v1611
          %v1750 = vpack.c.b16 %v1735, %v1734
          %v1751 = vpack.c.b16 %v1737, %v1736
          %v1752 = vpack.c.b16 %v1739, %v1738
          %v1753 = vpack.c.b16 %v1741, %v1740
          %v1754 = vpack.c.b16 %v1743, %v1742
          %v1755 = vpack.c.b16 %v1745, %v1744
          %v1756 = vpack.c.b16 %v1747, %v1746
          %v1757 = vpack.c.b16 %v1749, %v1748
          %1766 = vmatprep.subr.bf16.mxu0 0
          %1767 = vmatpush1.bf16.msra.mxu0 %v1757
          %1768 = vmatprep.subr.bf16.mxu0 0
          %1769 = vmatpush1.bf16.msra.mxu0 %v1756
          %1770 = vmatprep.subr.bf16.mxu0 0
          %1771 = vmatpush1.bf16.msra.mxu0 %v1755
          %1772 = vmatprep.subr.bf16.mxu0 0
          %1773 = vmatpush1.bf16.msra.mxu0 %v1754
          %1774 = vmatprep.subr.bf16.mxu0 0
          %1775 = vmatpush1.bf16.msra.mxu0 %v1753
          %1776 = vmatprep.subr.bf16.mxu0 0
          %1777 = vmatpush1.bf16.msra.mxu0 %v1752
          %1778 = vmatprep.subr.bf16.mxu0 0
          %1779 = vmatpush1.bf16.msra.mxu0 %v1751
          %1780 = vmatprep.subr.bf16.mxu0 0
          %1781 = vmatpush1.bf16.msra.mxu0 %v1750
          %1782 = vmatprep.subr.bf16.mxu0 0
          %1783 = vmatpush2.bf16.msra.mxu0 0
          %1784 = vmatprep.subr.bf16.mxu0 0
          %1785 = vmatpush2.bf16.msra.mxu0 0
          %1786 = vmatprep.subr.bf16.mxu0 0
          %1787 = vmatpush2.bf16.msra.mxu0 0
          %1788 = vmatprep.subr.bf16.mxu0 0
          %1789 = vmatpush2.bf16.msra.mxu0 0
          %1790 = vmatprep.subr.bf16.mxu0 0
          %1791 = vmatpush2.bf16.msra.mxu0 0
          %1792 = vmatprep.subr.bf16.mxu0 0
          %1793 = vmatpush2.bf16.msra.mxu0 0
          %1794 = vmatprep.subr.bf16.mxu0 0
          %1795 = vmatpush2.bf16.msra.mxu0 0
          %1796 = vmatprep.subr.bf16.mxu0 0
          %1797 = vmatpush2.bf16.msra.mxu0 0
          %1798 = vmatprep.mubr.bf16.mxu0 0
          %1799 = vmatmul.mubr.bf16.gmra.mxu0 %v1595
          %v1800 = vpop.f32.mrf.mxu0
          %v1801 = vadd.f32 %v1713, %v1800
          %v1802 = vpop.f32.mrf.mxu0
          %v1803 = vpop.f32.mrf.mxu0
          %v1804 = vpop.f32.mrf.mxu0
          %1805 = vdwg.mxu0
          %v1806 = vld [vmem:[%s937] sm:$0x1]
          %v1808 = vlaneseq
          %v1809 = vshrl.u32 %v1808, 7
          %v1810 = vsub.s32 0, %v1809
          %v1811 = vrot.slane %v1806, %v1810
          %v1813 = vadd.f32 %v1801, %v1811
          %v1814 = vmax.f32 %v1813, 0.0
          %v1815 = vpack.c.bf16 %v1814, %v1814
          %v1816 = vld [vmem:[%s797] sm:$0xf]
          %v1817 = vld [vmem:[%s797 + $0x4] sm:$0xf]
          %v1818 = vld [vmem:[%s797 + $0x8] sm:$0xf]
          %v1819 = vld [vmem:[%s797 + $0xc] sm:$0xf]
          %v1820 = vld [vmem:[%s797 + $0x10] sm:$0xf]
          %v1821 = vld [vmem:[%s797 + $0x14] sm:$0xf]
          %v1822 = vld [vmem:[%s797 + $0x18] sm:$0xf]
          %v1823 = vld [vmem:[%s797 + $0x1c] sm:$0xf]
          %v1824 = vld [vmem:[%s797 + $0x20] sm:$0xf]
          %v1825 = vld [vmem:[%s797 + $0x24] sm:$0xf]
          %v1826 = vld [vmem:[%s797 + $0x28] sm:$0xf]
          %v1827 = vld [vmem:[%s797 + $0x2c] sm:$0xf]
          %v1828 = vld [vmem:[%s797 + $0x30] sm:$0xf]
          %v1829 = vld [vmem:[%s797 + $0x34] sm:$0xf]
          %v1830 = vld [vmem:[%s797 + $0x38] sm:$0xf]
          %v1831 = vld [vmem:[%s797 + $0x3c] sm:$0xf]
          %v1832 = vld [vmem:[%s940] sm:$0x1]
          %v1834 = vlaneseq
          %v1835 = vshrl.u32 %v1834, 7
          %v1836 = vsub.s32 0, %v1835
          %v1837 = vrot.slane %v1832, %v1836
          %v1855 = vunpack.c.l.b16 %v1816
          %v1856 = vunpack.c.l.b16 %v1817
          %v1857 = vunpack.c.l.b16 %v1818
          %v1858 = vunpack.c.l.b16 %v1819
          %v1859 = vunpack.c.l.b16 %v1820
          %v1860 = vunpack.c.l.b16 %v1821
          %v1861 = vunpack.c.l.b16 %v1822
          %v1862 = vunpack.c.l.b16 %v1823
          %v1863 = vunpack.c.l.b16 %v1824
          %v1864 = vunpack.c.l.b16 %v1825
          %v1865 = vunpack.c.l.b16 %v1826
          %v1866 = vunpack.c.l.b16 %v1827
          %v1867 = vunpack.c.l.b16 %v1828
          %v1868 = vunpack.c.l.b16 %v1829
          %v1869 = vunpack.c.l.b16 %v1830
          %v1870 = vunpack.c.l.b16 %v1831
          %v1871 = vpack.c.b16 %v1856, %v1855
          %v1872 = vpack.c.b16 %v1858, %v1857
          %v1873 = vpack.c.b16 %v1860, %v1859
          %v1874 = vpack.c.b16 %v1862, %v1861
          %v1875 = vpack.c.b16 %v1864, %v1863
          %v1876 = vpack.c.b16 %v1866, %v1865
          %v1877 = vpack.c.b16 %v1868, %v1867
          %v1878 = vpack.c.b16 %v1870, %v1869
          %1887 = vmatprep.subr.bf16.mxu0 0
          %1888 = vmatpush1.bf16.msra.mxu0 %v1878
          %1889 = vmatprep.subr.bf16.mxu0 0
          %1890 = vmatpush1.bf16.msra.mxu0 %v1877
          %1891 = vmatprep.subr.bf16.mxu0 0
          %1892 = vmatpush1.bf16.msra.mxu0 %v1876
          %1893 = vmatprep.subr.bf16.mxu0 0
          %1894 = vmatpush1.bf16.msra.mxu0 %v1875
          %1895 = vmatprep.subr.bf16.mxu0 0
          %1896 = vmatpush1.bf16.msra.mxu0 %v1874
          %1897 = vmatprep.subr.bf16.mxu0 0
          %1898 = vmatpush1.bf16.msra.mxu0 %v1873
          %1899 = vmatprep.subr.bf16.mxu0 0
          %1900 = vmatpush1.bf16.msra.mxu0 %v1872
          %1901 = vmatprep.subr.bf16.mxu0 0
          %1902 = vmatpush1.bf16.msra.mxu0 %v1871
          %1903 = vmatprep.subr.bf16.mxu0 0
          %1904 = vmatpush2.bf16.msra.mxu0 0
          %1905 = vmatprep.subr.bf16.mxu0 0
          %1906 = vmatpush2.bf16.msra.mxu0 0
          %1907 = vmatprep.subr.bf16.mxu0 0
          %1908 = vmatpush2.bf16.msra.mxu0 0
          %1909 = vmatprep.subr.bf16.mxu0 0
          %1910 = vmatpush2.bf16.msra.mxu0 0
          %1911 = vmatprep.subr.bf16.mxu0 0
          %1912 = vmatpush2.bf16.msra.mxu0 0
          %1913 = vmatprep.subr.bf16.mxu0 0
          %1914 = vmatpush2.bf16.msra.mxu0 0
          %1915 = vmatprep.subr.bf16.mxu0 0
          %1916 = vmatpush2.bf16.msra.mxu0 0
          %1917 = vmatprep.subr.bf16.mxu0 0
          %1918 = vmatpush2.bf16.msra.mxu0 0
          %1919 = vmatprep.mubr.bf16.mxu0 0
          %1920 = vmatmul.mubr.bf16.gmra.mxu0 %v1815
          %v1921 = vpop.f32.mrf.mxu0
          %v1922 = vadd.f32 %v1837, %v1921
          %v1923 = vpop.f32.mrf.mxu0
          %v1924 = vpop.f32.mrf.mxu0
          %v1925 = vpop.f32.mrf.mxu0
          %1926 = vdwg.mxu0
          %v1927 = vmax.f32 %v1922, 0.0
          %v1928 = vadd.f32 %v1594, %v1927
          %1929 = vst [vmem:[#allocation2] sm:$0xff] %v1928
        $region128: #{tpu_custom_call.1} parent=91 // pred_fallthru
          _
        %p1930 = scmp.eq.s32.totalorder %s46, 1
        %p1931 = pnand %p1930, %p943
        %p1932 = pneg %p1931
        // Predicated region
        $region129: #{tpu_custom_call.1} parent=91 // pred_check
          _
        $region130: #{tpu_custom_call.1} parent=91 // pred_check_branch
          %1934 = sbr.rel (%p1931) target = $region132
        $region131: #{tpu_custom_call.1} parent=91 // pred_region
          %v1935 = vld [vmem:[#allocation2] sm:$0xff]
          %1936 = vst [vmem:[#allocation17] sm:$0xff] %v1935
        $region132: #{tpu_custom_call.1} parent=91 // pred_fallthru
          _
        // Predicated region
        $region133: #{tpu_custom_call.1} parent=91 // pred_check
          %p1937 = pneg %p520
        $region134: #{tpu_custom_call.1} parent=91 // pred_check_branch
          %1939 = sbr.rel (%p1937) target = $region136
        $region135: #{tpu_custom_call.1} parent=91 // pred_region
          %s1941 = ssub.s32 128, 128
          %1942 = vsyncadd [#allocation8], %s1941
          %s1944 = sshll.u32 [#allocation17], 4
          %s1945 = int_to_ptr.vmem [resolvable:$true] %s1944
          %1947 = dma.vmem_to_hbm [thread:$0]  %s1945, 128, %s18, [#allocation8]
        $region136: #{tpu_custom_call.1} parent=91 // pred_fallthru
          _
        // Predicated region
        $region137: #{tpu_custom_call.1} parent=91 // pred_check
          %p1948 = pneg %p520
        $region138: #{tpu_custom_call.1} parent=91 // pred_check_branch
          %1950 = sbr.rel (%p1948) target = $region140
        $region139: #{tpu_custom_call.1} parent=91 // pred_region
          %1951 = dma.done [#allocation8], 128
        $region140: #{tpu_custom_call.1} parent=91 // pred_fallthru
          _
      $region92: #{tpu_custom_call.1} parent=5 // pred_fallthru
        _
      %p1952 = scmp.le.s32.totalorder 2, %s37
      // Predicated region
      $region141: #{tpu_custom_call.1} parent=5 // pred_check
        %p1953 = pneg %p1952
      $region142: #{tpu_custom_call.1} parent=5 // pred_check_branch
        %1955 = sbr.rel (%p1953) target = $region144
      $region143: #{tpu_custom_call.1} parent=5 // pred_region
        %s1956 = ssub.s32 %s37, 2
      $region144: #{tpu_custom_call.1} parent=5 // pred_fallthru
        _
    $region6: #{tpu_custom_call.1} parent=1 // loop_footer
      %s41 = sadd.s32 1, %s37
    $region7: #{tpu_custom_call.1} parent=1 // loop_footer_branch
      %36 = sbr.rel target = $region3
    $region8: #{tpu_custom_call.1} parent=1 // loop_exit
      _
    %1957 = vsyncpa [#allocation7], 1
    %s1958 = scalar_lea.sflag [#allocation7], 1
    %1959 = vsyncpa %s1958, 1
    %1960 = vsyncpa [#allocation10], 1
    %s1961 = scalar_lea.sflag [#allocation10], 1
    %1962 = vsyncpa %s1961, 1
    %1963 = vsyncpa [#allocation13], 1
    %s1964 = scalar_lea.sflag [#allocation13], 1
    %1965 = vsyncpa %s1964, 1
    %1966 = vsyncpa [#allocation16], 1
    %s1967 = scalar_lea.sflag [#allocation16], 1
    %1968 = vsyncpa %s1967, 1
    %1969 = vsyncpa [#allocation8], 1
    %s1970 = scalar_lea.sflag [#allocation8], 1
    %1971 = vsyncpa %s1970, 1

</llo_original>
